<compile_context>
chip_gen: v6e
topology: v6e:2x2x1
jax: 0.10.0
libtpu: 0.0.40
codegen_flags: <defaults>
</compile_context>

<pallas_src>
import math
from functools import partial

import jax
import jax.numpy as jnp
from jax.experimental import pallas as pl
from jax.experimental.pallas import tpu as pltpu


# ----------------------------------------------------------------------------- glue ---
def pos2posemb2d(pos, num_pos_feats=128, temperature=10000):
    """JAX port of cosense3d's sinusoidal 2D positional encoding (glue, not hot path)."""
    scale = 2.0 * math.pi
    pos = pos * scale
    dim_t = jnp.arange(num_pos_feats, dtype=jnp.float32)
    dim_t = temperature ** (2.0 * (dim_t // 2) / num_pos_feats)
    pos_x = pos[..., 0, None] / dim_t
    pos_y = pos[..., 1, None] / dim_t
    pos_x = jnp.stack((jnp.sin(pos_x[..., 0::2]), jnp.cos(pos_x[..., 1::2])),
                      axis=-1).reshape(pos.shape[0], -1)
    pos_y = jnp.stack((jnp.sin(pos_y[..., 0::2]), jnp.cos(pos_y[..., 1::2])),
                      axis=-1).reshape(pos.shape[0], -1)
    return jnp.concatenate((pos_y, pos_x), axis=-1)


# -------------------------------------------------- fused multi-batch-tile kernel ------
def _fused_kernel(peq_ref, pem_ref, kv_ref, qc_ref, mct_ref,
                  w1_ref, w2_ref, b_ref, o_ref, *, n_nbr):
    Mq = peq_ref.shape[0]              # Bt * S queries in this tile
    Mk = pem_ref.shape[0]              # Bt * L memory tokens in this tile
    D = kv_ref.shape[1]
    inv_sqrt_d = 1.0 / math.sqrt(D)

    kv = kv_ref[...]                   # (Mk, D)   memory features
    qc = qc_ref[...]                   # (Mq, 3)   [b, x, y]
    mct = mct_ref[0]                   # (3, Mk)   memory coords, tokens on the lane axis

    # ---- positional-embedding MLPs (fused; packed weights are VMEM-resident) --------
    def mlp(x, w1, b1, w2, b2):
        h = jnp.maximum(jnp.dot(x, w1, preferred_element_type=jnp.float32) + b1, 0.0)
        return jnp.dot(h, w2, preferred_element_type=jnp.float32) + b2

    # 1/sqrt(D) folded into q once (not per-neighbour on the logits)
    q = mlp(peq_ref[...], w1_ref[0], b_ref[0:1], w2_ref[0], b_ref[1:2]) * inv_sqrt_d
    kvpe = mlp(pem_ref[...], w1_ref[1], b_ref[2:3], w2_ref[1], b_ref[3:4]) + kv

    # ---- squared pairwise distance; cross-batch pairs inside the tile masked --------
    dx = qc[:, 1:2] - mct[1:2, :]                     # (Mq, Mk)
    dy = qc[:, 2:3] - mct[2:3, :]                     # (Mq, Mk)
    d2 = dx * dx + dy * dy
    same = qc[:, 0:1] == mct[0:1, :]                  # batch-index match
    d2 = jnp.where(same, d2, jnp.float32(1e30))       # large finite (keeps key monotone)

    # ---- k-NN with packed value+index keys: ONE cross-lane min per neighbour --------
    # d2 >= 0, so bitcast(int32) preserves ordering; clear the low ceil(log2(Mk)) bits
    # and OR in the column index -> jnp.min returns distance AND argmin together.
    nbits = max(1, (Mk - 1).bit_length())
    idx_mask = (1 << nbits) - 1
    col_ids = jax.lax.broadcasted_iota(jnp.int32, (Mq, Mk), 1)
    key = (pltpu.bitcast(d2, jnp.int32) & jnp.int32(~idx_mask)) | col_ids
    sentinel = jnp.int32(2 ** 31 - 1)

    onehots = []
    for _ in range(n_nbr):
        kmin = jnp.min(key, axis=-1, keepdims=True)   # single XLU reduction
        sel = key == kmin                             # keys are unique per row
        onehots.append(sel.astype(jnp.float32))       # built directly in matmul dtype
        key = jnp.where(sel, sentinel, key)
    # rows ordered k-major (row = k*Mq + m); block-diagonal over the folded batches
    oh = jnp.concatenate(onehots, axis=0)             # (n_nbr*Mq, Mk)

    # ---- exact f32 gather: two block-diagonal MXU matmuls with K = Bt*L --------------
    gpe = jnp.dot(oh, kvpe, preferred_element_type=jnp.float32)   # (n_nbr*Mq, D)
    gkv = jnp.dot(oh, kv, preferred_element_type=jnp.float32)     # (n_nbr*Mq, D)

    # ---- per-neighbour softmax over channels + weighting (no q_rep concat) -----------
    cols = []
    for k in range(n_nbr):
        pe_k = gpe[k * Mq:(k + 1) * Mq, :]            # sublane-aligned static slices
        kv_k = gkv[k * Mq:(k + 1) * Mq, :]
        logits = q * pe_k
        logits = logits - jnp.max(logits, axis=-1, keepdims=True)
        e = jnp.exp(logits)
        attn = e * pl.reciprocal(jnp.sum(e, axis=-1, keepdims=True), approx=True)
        cols.append(attn * kv_k)

    # ---- lane-dense store in the final (Bt*S, n_nbr*D) order -------------------------
    o_ref[...] = jnp.concatenate(cols, axis=-1).astype(o_ref.dtype)


def neighborhood_attention(memory, mem_coor, q_coor, B, params, *, n_nbr,
                           num_pose_feat, batch_tile=None):
    """Pallas forward. Assumes tokens are grouped contiguously per batch with equal
    per-batch counts (S queries / L memory rows per batch)."""
    qw1, qb1, qw2, qb2, kw1, kb1, kw2, kb2 = params
    D = qw2.shape[1]
    P2 = 2 * num_pose_feat

    S = q_coor.shape[0] // B
    L = memory.shape[0] // B
    assert n_nbr <= L, "n_nbr must not exceed tokens per batch"

    if batch_tile is None:
        # fold half the batches per step: amortizes per-step overhead while keeping the
        # grid length even so the 'parallel' axis splits across v7x's two TensorCores.
        batch_tile = B // 2 if (B % 2 == 0 and B > 1) else B
    assert B % batch_tile == 0
    G = B // batch_tile
    Mq, Mk = batch_tile * S, batch_tile * L

    pe_q = pos2posemb2d(q_coor[:, 1:], num_pose_feat)             # (B*S, P2)
    pe_m = pos2posemb2d(mem_coor[:, 1:], num_pose_feat)           # (B*L, P2)
    mct = jnp.transpose(mem_coor.reshape(G, Mk, 3), (0, 2, 1))    # (G, 3, Mk) tiny

    # pack the 8 weight/bias tensors into 3 arrays -> fewer BlockSpec windows / DMAs
    w1s = jnp.stack([qw1, kw1])                                   # (2, P2, D)
    w2s = jnp.stack([qw2, kw2])                                   # (2, D, D)
    bs = jnp.stack([qb1, qb2, kb1, kb2])                          # (4, D)

    out = pl.pallas_call(
        partial(_fused_kernel, n_nbr=n_nbr),
        out_shape=jax.ShapeDtypeStruct((B * S, n_nbr * D), jnp.float32),
        grid=(G,),
        in_specs=[
            pl.BlockSpec((Mq, P2), lambda g: (g, 0)),             # query pos-emb
            pl.BlockSpec((Mk, P2), lambda g: (g, 0)),             # memory pos-emb
            pl.BlockSpec((Mk, D), lambda g: (g, 0)),              # kv features
            pl.BlockSpec((Mq, 3), lambda g: (g, 0)),              # query coords
            pl.BlockSpec((1, 3, Mk), lambda g: (g, 0, 0)),        # memory coords^T
            pl.BlockSpec((2, P2, D), lambda g: (0, 0, 0)),        # packed w1
            pl.BlockSpec((2, D, D), lambda g: (0, 0, 0)),         # packed w2
            pl.BlockSpec((4, D), lambda g: (0, 0)),               # packed biases
        ],
        out_specs=pl.BlockSpec((Mq, n_nbr * D), lambda g: (g, 0)),
        compiler_params=pltpu.CompilerParams(dimension_semantics=("parallel",)),
    )(pe_q, pe_m, memory, q_coor, mct, w1s, w2s, bs)

    # kernel already writes (B*S, n_nbr*D) in the final order -> free contiguous reshape
    return out.reshape(B, S, n_nbr, D)


# ------------------------------------------------------------------- pure-JAX reference
def reference_forward(memory, mem_coor, q_coor, B, params, *, n_nbr, num_pose_feat):
    qw1, qb1, qw2, qb2, kw1, kb1, kw2, kb2 = params

    def mlp(x, w1, b1, w2, b2):
        return jnp.maximum(x @ w1 + b1, 0.0) @ w2 + b2

    query = mlp(pos2posemb2d(q_coor[:, 1:], num_pose_feat), qw1, qb1, qw2, qb2)
    mpos = mlp(pos2posemb2d(mem_coor[:, 1:], num_pose_feat), kw1, kb1, kw2, kb2)
    kv_pe = mpos + memory
    D = query.shape[1]
    outs = []
    for b in range(B):
        qm = q_coor[:, 0] == b
        km = mem_coor[:, 0] == b
        qb_ = query[qm]
        kvb = memory[km]
        kvpeb = kv_pe[km]
        dists = jnp.linalg.norm(q_coor[qm][:, None, :] - mem_coor[km][None, :, :], axis=-1)
        _, inds = jax.lax.top_k(-dists, n_nbr)           # (S, n_nbr) nearest neighbours
        prod = qb_[:, None, :] * kvpeb[inds] / math.sqrt(D)
        attn = jax.nn.softmax(prod, axis=-1)
        outs.append(attn * kvb[inds])
    return jnp.stack(outs, axis=0)


# -------------------------------------------------------------------------------- main
if __name__ == "__main__":
    B, S, L = 8, 8, 16          # batches, queries per batch, memory tokens per batch
    EMB_DIM = 32                # emb_dim (D)
    NUM_POSE_FEAT = 64          # -> pos embedding width 2*64 = 128
    N_NBR = 4                   # neighbours per query (n_nbr*D = 128, lane-dense output)

    key = jax.random.PRNGKey(0)
    ks = jax.random.split(key, 16)

    def linear_init(kw, kb, fan_in, fan_out):
        bound = 1.0 / math.sqrt(fan_in)
        w = jax.random.uniform(kw, (fan_in, fan_out), jnp.float32, -bound, bound)
        b = jax.random.uniform(kb, (fan_out,), jnp.float32, -bound, bound)
        return w, b

    qw1, qb1 = linear_init(ks[0], ks[1], 2 * NUM_POSE_FEAT, EMB_DIM)
    qw2, qb2 = linear_init(ks[2], ks[3], EMB_DIM, EMB_DIM)
    kw1, kb1 = linear_init(ks[4], ks[5], 2 * NUM_POSE_FEAT, EMB_DIM)
    kw2, kb2 = linear_init(ks[6], ks[7], EMB_DIM, EMB_DIM)
    params = (qw1, qb1, qw2, qb2, kw1, kb1, kw2, kb2)

    memory = jax.random.normal(ks[8], (B * L, EMB_DIM), jnp.float32)
    mem_xy = jax.random.uniform(ks[9], (B * L, 2), jnp.float32)
    q_xy = jax.random.uniform(ks[10], (B * S, 2), jnp.float32)
    mem_coor = jnp.concatenate(
        [jnp.repeat(jnp.arange(B, dtype=jnp.float32), L)[:, None], mem_xy], axis=1)
    q_coor = jnp.concatenate(
        [jnp.repeat(jnp.arange(B, dtype=jnp.float32), S)[:, None], q_xy], axis=1)

    out = neighborhood_attention(memory, mem_coor, q_coor, B, params,
                                 n_nbr=N_NBR, num_pose_feat=NUM_POSE_FEAT,
                                 batch_tile=4)        # grid=(2,) stays even for v7x
    out = jax.block_until_ready(out)
    assert out.shape == (B, S, N_NBR, EMB_DIM), out.shape
    assert bool(jnp.all(jnp.isfinite(out)))

    ref = reference_forward(memory, mem_coor, q_coor, B, params,
                            n_nbr=N_NBR, num_pose_feat=NUM_POSE_FEAT)
    assert bool(jnp.allclose(out, ref, rtol=2e-2, atol=2e-2)), (
        float(jnp.max(jnp.abs(out - ref))))

    print("KERNEL_OK")
</pallas_src>

<mosaic_0001>
module attributes {stable_mosaic.version = 11 : i64} {
  func.func @_fused_kernel(%arg0: i32, %arg1: memref<32x128xf32, #tpu.memory_space<vmem>>, %arg2: memref<64x128xf32, #tpu.memory_space<vmem>>, %arg3: memref<64x32xf32, #tpu.memory_space<vmem>>, %arg4: memref<32x3xf32, #tpu.memory_space<vmem>>, %arg5: memref<1x3x64xf32, #tpu.memory_space<vmem>>, %arg6: memref<2x128x32xf32, #tpu.memory_space<vmem>>, %arg7: memref<2x32x32xf32, #tpu.memory_space<vmem>>, %arg8: memref<4x32xf32, #tpu.memory_space<vmem>>, %arg9: memref<32x128xf32, #tpu.memory_space<vmem>>) attributes {dimension_semantics = [#tpu.dimension_semantics<parallel>], iteration_bounds = array<i64: 2>, scalar_prefetch = 0 : i64, scratch_operands = 0 : i64, tpu.core_type = #tpu.core_type<tc>, window_params = [{transform_indices = @transform_0, window_bounds = array<i64: 32, 128>}, {transform_indices = @transform_1, window_bounds = array<i64: 64, 128>}, {transform_indices = @transform_2, window_bounds = array<i64: 64, 32>}, {transform_indices = @transform_3, window_bounds = array<i64: 32, 3>}, {transform_indices = @transform_4, window_bounds = array<i64: 1, 3, 64>}, {pipeline_mode = #tpu.pipeline_mode<synchronous>, transform_indices = @transform_5, window_bounds = array<i64: 2, 128, 32>}, {pipeline_mode = #tpu.pipeline_mode<synchronous>, transform_indices = @transform_6, window_bounds = array<i64: 2, 32, 32>}, {pipeline_mode = #tpu.pipeline_mode<synchronous>, transform_indices = @transform_7, window_bounds = array<i64: 4, 32>}, {transform_indices = @transform_8, window_bounds = array<i64: 32, 128>}]} {
    %c0 = arith.constant 0 : index
    %c0_0 = arith.constant 0 : index
    %0 = vector.load %arg3[%c0, %c0_0] : memref<64x32xf32, #tpu.memory_space<vmem>>, vector<64x32xf32>
    %c0_1 = arith.constant 0 : index
    %c0_2 = arith.constant 0 : index
    %1 = vector.load %arg4[%c0_1, %c0_2] : memref<32x3xf32, #tpu.memory_space<vmem>>, vector<32x3xf32>
    %c0_3 = arith.constant 0 : index
    %c0_4 = arith.constant 0 : index
    %c0_5 = arith.constant 0 : index
    %2 = vector.load %arg5[%c0_3, %c0_4, %c0_5] : memref<1x3x64xf32, #tpu.memory_space<vmem>>, vector<1x3x64xf32>
    %3 = vector.shape_cast %2 : vector<1x3x64xf32> to vector<3x64xf32>
    %c0_6 = arith.constant 0 : index
    %c0_7 = arith.constant 0 : index
    %4 = vector.load %arg1[%c0_6, %c0_7] : memref<32x128xf32, #tpu.memory_space<vmem>>, vector<32x128xf32>
    %c0_8 = arith.constant 0 : index
    %c0_9 = arith.constant 0 : index
    %c0_10 = arith.constant 0 : index
    %5 = vector.load %arg6[%c0_8, %c0_9, %c0_10] : memref<2x128x32xf32, #tpu.memory_space<vmem>>, vector<1x128x32xf32>
    %6 = vector.shape_cast %5 : vector<1x128x32xf32> to vector<128x32xf32>
    %c0_11 = arith.constant 0 : index
    %c0_12 = arith.constant 0 : index
    %7 = vector.load %arg8[%c0_11, %c0_12] : memref<4x32xf32, #tpu.memory_space<vmem>>, vector<1x32xf32>
    %c0_13 = arith.constant 0 : index
    %c0_14 = arith.constant 0 : index
    %c0_15 = arith.constant 0 : index
    %8 = vector.load %arg7[%c0_13, %c0_14, %c0_15] : memref<2x32x32xf32, #tpu.memory_space<vmem>>, vector<1x32x32xf32>
    %9 = vector.shape_cast %8 : vector<1x32x32xf32> to vector<32x32xf32>
    %c1 = arith.constant 1 : index
    %c0_16 = arith.constant 0 : index
    %10 = vector.load %arg8[%c1, %c0_16] : memref<4x32xf32, #tpu.memory_space<vmem>>, vector<1x32xf32>
    %cst = arith.constant dense<0.000000e+00> : vector<32x32xf32>
    %11 = tpu.matmul %4, %6, %cst {dimension_numbers = #tpu.dot_dimension_numbers<[1], [0], [0], [1], [0, 0, 1, 1], [], []>} : vector<32x128xf32>, vector<128x32xf32>, vector<32x32xf32> -> vector<32x32xf32>
    %12 = vector.broadcast %7 : vector<1x32xf32> to vector<32x32xf32>
    %13 = arith.addf %11, %12 : vector<32x32xf32>
    %cst_17 = arith.constant 0.000000e+00 : f32
    %14 = vector.broadcast %cst_17 : f32 to vector<32x32xf32>
    %15 = arith.maximumf %13, %14 : vector<32x32xf32>
    %cst_18 = arith.constant dense<0.000000e+00> : vector<32x32xf32>
    %16 = tpu.matmul %15, %9, %cst_18 {dimension_numbers = #tpu.dot_dimension_numbers<[1], [0], [0], [1], [0, 0, 1, 1], [], []>} : vector<32x32xf32>, vector<32x32xf32>, vector<32x32xf32> -> vector<32x32xf32>
    %17 = vector.broadcast %10 : vector<1x32xf32> to vector<32x32xf32>
    %18 = arith.addf %16, %17 : vector<32x32xf32>
    %cst_19 = arith.constant 0.176776692 : f32
    %19 = vector.broadcast %cst_19 : f32 to vector<32x32xf32>
    %20 = arith.mulf %18, %19 : vector<32x32xf32>
    %c0_20 = arith.constant 0 : index
    %c0_21 = arith.constant 0 : index
    %21 = vector.load %arg2[%c0_20, %c0_21] : memref<64x128xf32, #tpu.memory_space<vmem>>, vector<64x128xf32>
    %c1_22 = arith.constant 1 : index
    %c0_23 = arith.constant 0 : index
    %c0_24 = arith.constant 0 : index
    %22 = vector.load %arg6[%c1_22, %c0_23, %c0_24] : memref<2x128x32xf32, #tpu.memory_space<vmem>>, vector<1x128x32xf32>
    %23 = vector.shape_cast %22 : vector<1x128x32xf32> to vector<128x32xf32>
    %c2 = arith.constant 2 : index
    %c0_25 = arith.constant 0 : index
    %24 = vector.load %arg8[%c2, %c0_25] : memref<4x32xf32, #tpu.memory_space<vmem>>, vector<1x32xf32>
    %c1_26 = arith.constant 1 : index
    %c0_27 = arith.constant 0 : index
    %c0_28 = arith.constant 0 : index
    %25 = vector.load %arg7[%c1_26, %c0_27, %c0_28] : memref<2x32x32xf32, #tpu.memory_space<vmem>>, vector<1x32x32xf32>
    %26 = vector.shape_cast %25 : vector<1x32x32xf32> to vector<32x32xf32>
    %c3 = arith.constant 3 : index
    %c0_29 = arith.constant 0 : index
    %27 = vector.load %arg8[%c3, %c0_29] : memref<4x32xf32, #tpu.memory_space<vmem>>, vector<1x32xf32>
    %cst_30 = arith.constant dense<0.000000e+00> : vector<64x32xf32>
    %28 = tpu.matmul %21, %23, %cst_30 {dimension_numbers = #tpu.dot_dimension_numbers<[1], [0], [0], [1], [0, 0, 1, 1], [], []>} : vector<64x128xf32>, vector<128x32xf32>, vector<64x32xf32> -> vector<64x32xf32>
    %29 = vector.broadcast %24 : vector<1x32xf32> to vector<64x32xf32>
    %30 = arith.addf %28, %29 : vector<64x32xf32>
    %cst_31 = arith.constant 0.000000e+00 : f32
    %31 = vector.broadcast %cst_31 : f32 to vector<64x32xf32>
    %32 = arith.maximumf %30, %31 : vector<64x32xf32>
    %cst_32 = arith.constant dense<0.000000e+00> : vector<64x32xf32>
    %33 = tpu.matmul %32, %26, %cst_32 {dimension_numbers = #tpu.dot_dimension_numbers<[1], [0], [0], [1], [0, 0, 1, 1], [], []>} : vector<64x32xf32>, vector<32x32xf32>, vector<64x32xf32> -> vector<64x32xf32>
    %34 = vector.broadcast %27 : vector<1x32xf32> to vector<64x32xf32>
    %35 = arith.addf %33, %34 : vector<64x32xf32>
    %36 = arith.addf %35, %0 : vector<64x32xf32>
    %37 = vector.extract_strided_slice %1 {offsets = [0, 1], sizes = [32, 1], strides = [1, 1]} : vector<32x3xf32> to vector<32x1xf32>
    %38 = vector.extract_strided_slice %3 {offsets = [1, 0], sizes = [1, 64], strides = [1, 1]} : vector<3x64xf32> to vector<1x64xf32>
    %39 = vector.broadcast %37 : vector<32x1xf32> to vector<32x64xf32>
    %40 = vector.broadcast %38 : vector<1x64xf32> to vector<32x64xf32>
    %41 = arith.subf %39, %40 : vector<32x64xf32>
    %42 = vector.extract_strided_slice %1 {offsets = [0, 2], sizes = [32, 1], strides = [1, 1]} : vector<32x3xf32> to vector<32x1xf32>
    %43 = vector.extract_strided_slice %3 {offsets = [2, 0], sizes = [1, 64], strides = [1, 1]} : vector<3x64xf32> to vector<1x64xf32>
    %44 = vector.broadcast %42 : vector<32x1xf32> to vector<32x64xf32>
    %45 = vector.broadcast %43 : vector<1x64xf32> to vector<32x64xf32>
    %46 = arith.subf %44, %45 : vector<32x64xf32>
    %47 = arith.mulf %41, %41 : vector<32x64xf32>
    %48 = arith.mulf %46, %46 : vector<32x64xf32>
    %49 = arith.addf %47, %48 : vector<32x64xf32>
    %50 = vector.extract_strided_slice %1 {offsets = [0, 0], sizes = [32, 1], strides = [1, 1]} : vector<32x3xf32> to vector<32x1xf32>
    %51 = vector.extract_strided_slice %3 {offsets = [0, 0], sizes = [1, 64], strides = [1, 1]} : vector<3x64xf32> to vector<1x64xf32>
    %52 = vector.broadcast %50 : vector<32x1xf32> to vector<32x64xf32>
    %53 = vector.broadcast %51 : vector<1x64xf32> to vector<32x64xf32>
    %54 = arith.cmpf oeq, %52, %53 : vector<32x64xf32>
    %cst_33 = arith.constant 1.000000e+30 : f32
    %55 = vector.broadcast %cst_33 : f32 to vector<32x64xf32>
    %56 = arith.select %54, %49, %55 : vector<32x64xi1>, vector<32x64xf32>
    %57 = tpu.iota {dimensions = array<i32: 1>} : vector<32x64xi32>
    %58 = tpu.bitcast %56 : vector<32x64xf32> -> vector<32x64xi32>
    %c-64_i32 = arith.constant -64 : i32
    %59 = vector.broadcast %c-64_i32 : i32 to vector<32x64xi32>
    %60 = arith.andi %58, %59 : vector<32x64xi32>
    %61 = arith.ori %60, %57 : vector<32x64xi32>
    %cst_34 = arith.constant dense<2147483647> : vector<32xi32>
    %62 = vector.multi_reduction <minsi>, %61, %cst_34 [1] : vector<32x64xi32> to vector<32xi32>
    %63 = vector.shape_cast %62 : vector<32xi32> to vector<32x1xi32>
    %64 = vector.broadcast %63 : vector<32x1xi32> to vector<32x64xi32>
    %65 = arith.cmpi eq, %61, %64 : vector<32x64xi32>
    %66 = arith.extui %65 : vector<32x64xi1> to vector<32x64xi32>
    %67 = arith.sitofp %66 : vector<32x64xi32> to vector<32x64xf32>
    %c2147483647_i32 = arith.constant 2147483647 : i32
    %68 = vector.broadcast %c2147483647_i32 : i32 to vector<32x64xi32>
    %69 = arith.select %65, %68, %61 : vector<32x64xi1>, vector<32x64xi32>
    %cst_35 = arith.constant dense<2147483647> : vector<32xi32>
    %70 = vector.multi_reduction <minsi>, %69, %cst_35 [1] : vector<32x64xi32> to vector<32xi32>
    %71 = vector.shape_cast %70 : vector<32xi32> to vector<32x1xi32>
    %72 = vector.broadcast %71 : vector<32x1xi32> to vector<32x64xi32>
    %73 = arith.cmpi eq, %69, %72 : vector<32x64xi32>
    %74 = arith.extui %73 : vector<32x64xi1> to vector<32x64xi32>
    %75 = arith.sitofp %74 : vector<32x64xi32> to vector<32x64xf32>
    %c2147483647_i32_36 = arith.constant 2147483647 : i32
    %76 = vector.broadcast %c2147483647_i32_36 : i32 to vector<32x64xi32>
    %77 = arith.select %73, %76, %69 : vector<32x64xi1>, vector<32x64xi32>
    %cst_37 = arith.constant dense<2147483647> : vector<32xi32>
    %78 = vector.multi_reduction <minsi>, %77, %cst_37 [1] : vector<32x64xi32> to vector<32xi32>
    %79 = vector.shape_cast %78 : vector<32xi32> to vector<32x1xi32>
    %80 = vector.broadcast %79 : vector<32x1xi32> to vector<32x64xi32>
    %81 = arith.cmpi eq, %77, %80 : vector<32x64xi32>
    %82 = arith.extui %81 : vector<32x64xi1> to vector<32x64xi32>
    %83 = arith.sitofp %82 : vector<32x64xi32> to vector<32x64xf32>
    %c2147483647_i32_38 = arith.constant 2147483647 : i32
    %84 = vector.broadcast %c2147483647_i32_38 : i32 to vector<32x64xi32>
    %85 = arith.select %81, %84, %77 : vector<32x64xi1>, vector<32x64xi32>
    %cst_39 = arith.constant dense<2147483647> : vector<32xi32>
    %86 = vector.multi_reduction <minsi>, %85, %cst_39 [1] : vector<32x64xi32> to vector<32xi32>
    %87 = vector.shape_cast %86 : vector<32xi32> to vector<32x1xi32>
    %88 = vector.broadcast %87 : vector<32x1xi32> to vector<32x64xi32>
    %89 = arith.cmpi eq, %85, %88 : vector<32x64xi32>
    %90 = arith.extui %89 : vector<32x64xi1> to vector<32x64xi32>
    %91 = arith.sitofp %90 : vector<32x64xi32> to vector<32x64xf32>
    %92 = tpu.concatenate %67, %75, %83, %91 in 0 : vector<32x64xf32>, vector<32x64xf32>, vector<32x64xf32>, vector<32x64xf32> -> vector<128x64xf32>
    %cst_40 = arith.constant dense<0.000000e+00> : vector<128x32xf32>
    %93 = tpu.matmul %92, %36, %cst_40 {dimension_numbers = #tpu.dot_dimension_numbers<[1], [0], [0], [1], [0, 0, 1, 1], [], []>} : vector<128x64xf32>, vector<64x32xf32>, vector<128x32xf32> -> vector<128x32xf32>
    %cst_41 = arith.constant dense<0.000000e+00> : vector<128x32xf32>
    %94 = tpu.matmul %92, %0, %cst_41 {dimension_numbers = #tpu.dot_dimension_numbers<[1], [0], [0], [1], [0, 0, 1, 1], [], []>} : vector<128x64xf32>, vector<64x32xf32>, vector<128x32xf32> -> vector<128x32xf32>
    %95 = vector.extract_strided_slice %93 {offsets = [0, 0], sizes = [32, 32], strides = [1, 1]} : vector<128x32xf32> to vector<32x32xf32>
    %96 = vector.extract_strided_slice %94 {offsets = [0, 0], sizes = [32, 32], strides = [1, 1]} : vector<128x32xf32> to vector<32x32xf32>
    %97 = arith.mulf %20, %95 : vector<32x32xf32>
    %cst_42 = arith.constant dense<0xFF800000> : vector<32xf32>
    %98 = vector.multi_reduction <maximumf>, %97, %cst_42 [1] : vector<32x32xf32> to vector<32xf32>
    %99 = vector.shape_cast %98 : vector<32xf32> to vector<32x1xf32>
    %100 = vector.broadcast %99 : vector<32x1xf32> to vector<32x32xf32>
    %101 = arith.subf %97, %100 : vector<32x32xf32>
    %102 = math.exp %101 : vector<32x32xf32>
    %cst_43 = arith.constant dense<0.000000e+00> : vector<32xf32>
    %103 = vector.multi_reduction <add>, %102, %cst_43 [1] : vector<32x32xf32> to vector<32xf32>
    %104 = vector.shape_cast %103 : vector<32xf32> to vector<32x1xf32>
    %105 = tpu.reciprocal %104 {approx = true} : vector<32x1xf32> -> vector<32x1xf32>
    %106 = vector.broadcast %105 : vector<32x1xf32> to vector<32x32xf32>
    %107 = arith.mulf %102, %106 : vector<32x32xf32>
    %108 = arith.mulf %107, %96 : vector<32x32xf32>
    %109 = vector.extract_strided_slice %93 {offsets = [32, 0], sizes = [32, 32], strides = [1, 1]} : vector<128x32xf32> to vector<32x32xf32>
    %110 = vector.extract_strided_slice %94 {offsets = [32, 0], sizes = [32, 32], strides = [1, 1]} : vector<128x32xf32> to vector<32x32xf32>
    %111 = arith.mulf %20, %109 : vector<32x32xf32>
    %cst_44 = arith.constant dense<0xFF800000> : vector<32xf32>
    %112 = vector.multi_reduction <maximumf>, %111, %cst_44 [1] : vector<32x32xf32> to vector<32xf32>
    %113 = vector.shape_cast %112 : vector<32xf32> to vector<32x1xf32>
    %114 = vector.broadcast %113 : vector<32x1xf32> to vector<32x32xf32>
    %115 = arith.subf %111, %114 : vector<32x32xf32>
    %116 = math.exp %115 : vector<32x32xf32>
    %cst_45 = arith.constant dense<0.000000e+00> : vector<32xf32>
    %117 = vector.multi_reduction <add>, %116, %cst_45 [1] : vector<32x32xf32> to vector<32xf32>
    %118 = vector.shape_cast %117 : vector<32xf32> to vector<32x1xf32>
    %119 = tpu.reciprocal %118 {approx = true} : vector<32x1xf32> -> vector<32x1xf32>
    %120 = vector.broadcast %119 : vector<32x1xf32> to vector<32x32xf32>
    %121 = arith.mulf %116, %120 : vector<32x32xf32>
    %122 = arith.mulf %121, %110 : vector<32x32xf32>
    %123 = vector.extract_strided_slice %93 {offsets = [64, 0], sizes = [32, 32], strides = [1, 1]} : vector<128x32xf32> to vector<32x32xf32>
    %124 = vector.extract_strided_slice %94 {offsets = [64, 0], sizes = [32, 32], strides = [1, 1]} : vector<128x32xf32> to vector<32x32xf32>
    %125 = arith.mulf %20, %123 : vector<32x32xf32>
    %cst_46 = arith.constant dense<0xFF800000> : vector<32xf32>
    %126 = vector.multi_reduction <maximumf>, %125, %cst_46 [1] : vector<32x32xf32> to vector<32xf32>
    %127 = vector.shape_cast %126 : vector<32xf32> to vector<32x1xf32>
    %128 = vector.broadcast %127 : vector<32x1xf32> to vector<32x32xf32>
    %129 = arith.subf %125, %128 : vector<32x32xf32>
    %130 = math.exp %129 : vector<32x32xf32>
    %cst_47 = arith.constant dense<0.000000e+00> : vector<32xf32>
    %131 = vector.multi_reduction <add>, %130, %cst_47 [1] : vector<32x32xf32> to vector<32xf32>
    %132 = vector.shape_cast %131 : vector<32xf32> to vector<32x1xf32>
    %133 = tpu.reciprocal %132 {approx = true} : vector<32x1xf32> -> vector<32x1xf32>
    %134 = vector.broadcast %133 : vector<32x1xf32> to vector<32x32xf32>
    %135 = arith.mulf %130, %134 : vector<32x32xf32>
    %136 = arith.mulf %135, %124 : vector<32x32xf32>
    %137 = vector.extract_strided_slice %93 {offsets = [96, 0], sizes = [32, 32], strides = [1, 1]} : vector<128x32xf32> to vector<32x32xf32>
    %138 = vector.extract_strided_slice %94 {offsets = [96, 0], sizes = [32, 32], strides = [1, 1]} : vector<128x32xf32> to vector<32x32xf32>
    %139 = arith.mulf %20, %137 : vector<32x32xf32>
    %cst_48 = arith.constant dense<0xFF800000> : vector<32xf32>
    %140 = vector.multi_reduction <maximumf>, %139, %cst_48 [1] : vector<32x32xf32> to vector<32xf32>
    %141 = vector.shape_cast %140 : vector<32xf32> to vector<32x1xf32>
    %142 = vector.broadcast %141 : vector<32x1xf32> to vector<32x32xf32>
    %143 = arith.subf %139, %142 : vector<32x32xf32>
    %144 = math.exp %143 : vector<32x32xf32>
    %cst_49 = arith.constant dense<0.000000e+00> : vector<32xf32>
    %145 = vector.multi_reduction <add>, %144, %cst_49 [1] : vector<32x32xf32> to vector<32xf32>
    %146 = vector.shape_cast %145 : vector<32xf32> to vector<32x1xf32>
    %147 = tpu.reciprocal %146 {approx = true} : vector<32x1xf32> -> vector<32x1xf32>
    %148 = vector.broadcast %147 : vector<32x1xf32> to vector<32x32xf32>
    %149 = arith.mulf %144, %148 : vector<32x32xf32>
    %150 = arith.mulf %149, %138 : vector<32x32xf32>
    %151 = tpu.concatenate %108, %122, %136, %150 in 1 : vector<32x32xf32>, vector<32x32xf32>, vector<32x32xf32>, vector<32x32xf32> -> vector<32x128xf32>
    %c0_50 = arith.constant 0 : index
    %c0_51 = arith.constant 0 : index
    %152 = vector.load %arg9[%c0_50, %c0_51] : memref<32x128xf32, #tpu.memory_space<vmem>>, vector<32x128xf32>
    tpu.vector_store %arg9[%c0_50, %c0_51], %151 {strides = array<i32>} : memref<32x128xf32, #tpu.memory_space<vmem>>, vector<32x128xf32>,
    return
  }
  func.func @transform_0(%arg0: i32) -> (i32, i32) {
    %c0_i32 = arith.constant 0 : i32
    %c0_i32_0 = arith.constant 0 : i32
    return %arg0, %c0_i32 : i32, i32
  }
  func.func @transform_1(%arg0: i32) -> (i32, i32) {
    %c0_i32 = arith.constant 0 : i32
    %c0_i32_0 = arith.constant 0 : i32
    return %arg0, %c0_i32 : i32, i32
  }
  func.func @transform_2(%arg0: i32) -> (i32, i32) {
    %c0_i32 = arith.constant 0 : i32
    %c0_i32_0 = arith.constant 0 : i32
    return %arg0, %c0_i32 : i32, i32
  }
  func.func @transform_3(%arg0: i32) -> (i32, i32) {
    %c0_i32 = arith.constant 0 : i32
    %c0_i32_0 = arith.constant 0 : i32
    return %arg0, %c0_i32 : i32, i32
  }
  func.func @transform_4(%arg0: i32) -> (i32, i32, i32) {
    %c0_i32 = arith.constant 0 : i32
    %c0_i32_0 = arith.constant 0 : i32
    %c0_i32_1 = arith.constant 0 : i32
    return %arg0, %c0_i32, %c0_i32_0 : i32, i32, i32
  }
  func.func @transform_5(%arg0: i32) -> (i32, i32, i32) {
    %c0_i32 = arith.constant 0 : i32
    %c0_i32_0 = arith.constant 0 : i32
    %c0_i32_1 = arith.constant 0 : i32
    %c0_i32_2 = arith.constant 0 : i32
    return %c0_i32, %c0_i32_0, %c0_i32_1 : i32, i32, i32
  }
  func.func @transform_6(%arg0: i32) -> (i32, i32, i32) {
    %c0_i32 = arith.constant 0 : i32
    %c0_i32_0 = arith.constant 0 : i32
    %c0_i32_1 = arith.constant 0 : i32
    %c0_i32_2 = arith.constant 0 : i32
    return %c0_i32, %c0_i32_0, %c0_i32_1 : i32, i32, i32
  }
  func.func @transform_7(%arg0: i32) -> (i32, i32) {
    %c0_i32 = arith.constant 0 : i32
    %c0_i32_0 = arith.constant 0 : i32
    %c0_i32_1 = arith.constant 0 : i32
    return %c0_i32, %c0_i32_0 : i32, i32
  }
  func.func @transform_8(%arg0: i32) -> (i32, i32) {
    %c0_i32 = arith.constant 0 : i32
    %c0_i32_0 = arith.constant 0 : i32
    return %arg0, %c0_i32 : i32, i32
  }
}

</mosaic_0001>

<llo_original>
// kernel: tpu_custom_call.1
$region0: #{tpu_custom_call.1}
  #allocation0 [shape = 'u32[]', space=smem, size = 0x4, offset = 0x4, fixed_abs, tag = 'smem constant byte address 0x4 - core index']
  #allocation1 [shape = 'u32[144,128]{1,0:T(1,128)}', space=vmem, size = 0x12000, scoped, tag = 'internal scratch']
  %s0 = inlined_call_operand.vmem [shape: f32[64,128], index: 0, kind: input, shape index: {}]
  %s1 = inlined_call_operand.vmem [shape: f32[128,128], index: 1, kind: input, shape index: {}]
  %s2 = inlined_call_operand.vmem [shape: f32[128,32], index: 2, kind: input, shape index: {}]
  %s3 = inlined_call_operand.vmem [shape: f32[64,3], index: 3, kind: input, shape index: {}]
  %s4 = inlined_call_operand.vmem [shape: f32[2,3,64], index: 4, kind: input, shape index: {}]
  %s5 = inlined_call_operand.vmem [shape: f32[2,128,32], index: 5, kind: input, shape index: {}]
  %s6 = inlined_call_operand.vmem [shape: f32[2,32,32], index: 6, kind: input, shape index: {}]
  %s7 = inlined_call_operand.vmem [shape: f32[4,32], index: 7, kind: input, shape index: {}]
  %s8 = inlined_call_operand.hbm [shape: f32[64,128], index: 8, kind: output, shape index: {}]
  %s9 = sld [smem:[#allocation0]]
  $region65: #{tpu_custom_call.1} parent=0
    _
  %s11 = ssub.s32 1, %s9
  %s12 = scalar_select 0, %s11, %s9
  $region1: #{tpu_custom_call.1} parent=0
    #allocation2 [shape = 'u8[32768]{0}', space=vmem, size = 0x8000, scoped, tag = 'output window, operand 0']
    #allocation3 [shape = 's32[2]{0}', space=sflag, size = 0x8, scoped, tag = 'scoped memory for tpu_custom_call.1']
    %13 = vsyncpa [#allocation3], 0
    %s14 = scalar_lea.sflag [#allocation3], 1
    %15 = vsyncpa %s14, 0
    loop: start=0, step=1, limit=4
    $region2: #{tpu_custom_call.1} parent=1 // loop_pre_header
      _
    $region3: #{tpu_custom_call.1} parent=1 // loop_header
      %s17 = sphi 0, %s21
      %p18 = scmp.ge.s32.totalorder %s17, 4
      %s27 = sphi 0, %s29
      %s30 = sphi 0, %s27
      %s31 = sphi 0, %s30
      %s47 = sphi 0, %s31
      %s53 = sphi 0, %s55
      %s56 = sphi 0, %s53
      %s57 = sphi 0, %s56
      %s73 = sphi 0, %s57
      %s79 = sphi 0, %s81
      %s82 = sphi 0, %s79
      %s83 = sphi 0, %s82
      %s99 = sphi 0, %s83
      %s105 = sphi 0, %s107
      %s108 = sphi 0, %s105
      %s109 = sphi 0, %s108
      %s125 = sphi 0, %s109
      %s131 = sphi 0, %s133
      %s134 = sphi 0, %s131
      %s135 = sphi 0, %s134
      %s151 = sphi 0, %s135
      %s155 = sphi 0, %s155
      %s157 = sphi 0, %s155
      %s158 = sphi 0, %s157
      %s172 = sphi 0, %s158
      %s176 = sphi 0, %s176
      %s178 = sphi 0, %s176
      %s179 = sphi 0, %s178
      %s193 = sphi 0, %s179
      %s197 = sphi 0, %s197
      %s199 = sphi 0, %s197
      %s200 = sphi 0, %s199
      %s214 = sphi 0, %s200
      %s220 = sphi 0, %s222
      %s223 = sphi 0, %s220
      %s224 = sphi 0, %s223
      %s240 = sphi 0, %s224
    $region4: #{tpu_custom_call.1} parent=1 // loop_header_branch
      %20 = sbr.rel (%p18) target = $region8
    $region5: #{tpu_custom_call.1} parent=1 // loop_body
      %s22 = ssub.s32 %s17, 1
      %s23 = ssub.s32 %s17, 2
      %s24 = sadd.s32 %s17, 1
      %s25 = ssub.s32 %s17, %s24
      %p26 = scmp.eq.s32.totalorder %s25, 0
      %s28 = sadd.s32 %s27, 1
      %s29 = scalar_select %p26, %s27, %s28
      %p32 = pneg %p26
      %p33 = scmp.eq.s32.totalorder %s17, 1
      %p34 = por %p32, %p33
      %p35 = scmp.ne.s32.totalorder %s27, %s30
      %p36 = scmp.eq.s32.totalorder %s17, 0
      %p37 = por %p35, %p36
      %p38 = scmp.ne.s32.totalorder %s27, %s30
      %p39 = scmp.eq.s32.totalorder %s22, 1
      %p40 = por %p38, %p39
      %p41 = scmp.ne.s32.totalorder %s30, %s31
      %p42 = scmp.eq.s32.totalorder %s22, 0
      %p43 = por %p41, %p42
      %p44 = scmp.ne.s32.totalorder %s30, %s31
      %p45 = scmp.eq.s32.totalorder %s23, 1
      %p46 = por %p44, %p45
      %p48 = scmp.ne.s32.totalorder %s31, %s47
      %p49 = scmp.eq.s32.totalorder %s23, 0
      %p50 = por %p48, %p49
      %s51 = ssub.s32 %s17, %s24
      %p52 = scmp.eq.s32.totalorder %s51, 0
      %s54 = sadd.s32 %s53, 1
      %s55 = scalar_select %p52, %s53, %s54
      %p58 = pneg %p52
      %p59 = scmp.eq.s32.totalorder %s17, 1
      %p60 = por %p58, %p59
      %p61 = scmp.ne.s32.totalorder %s53, %s56
      %p62 = scmp.eq.s32.totalorder %s17, 0
      %p63 = por %p61, %p62
      %p64 = scmp.ne.s32.totalorder %s53, %s56
      %p65 = scmp.eq.s32.totalorder %s22, 1
      %p66 = por %p64, %p65
      %p67 = scmp.ne.s32.totalorder %s56, %s57
      %p68 = scmp.eq.s32.totalorder %s22, 0
      %p69 = por %p67, %p68
      %p70 = scmp.ne.s32.totalorder %s56, %s57
      %p71 = scmp.eq.s32.totalorder %s23, 1
      %p72 = por %p70, %p71
      %p74 = scmp.ne.s32.totalorder %s57, %s73
      %p75 = scmp.eq.s32.totalorder %s23, 0
      %p76 = por %p74, %p75
      %s77 = ssub.s32 %s17, %s24
      %p78 = scmp.eq.s32.totalorder %s77, 0
      %s80 = sadd.s32 %s79, 1
      %s81 = scalar_select %p78, %s79, %s80
      %p84 = pneg %p78
      %p85 = scmp.eq.s32.totalorder %s17, 1
      %p86 = por %p84, %p85
      %p87 = scmp.ne.s32.totalorder %s79, %s82
      %p88 = scmp.eq.s32.totalorder %s17, 0
      %p89 = por %p87, %p88
      %p90 = scmp.ne.s32.totalorder %s79, %s82
      %p91 = scmp.eq.s32.totalorder %s22, 1
      %p92 = por %p90, %p91
      %p93 = scmp.ne.s32.totalorder %s82, %s83
      %p94 = scmp.eq.s32.totalorder %s22, 0
      %p95 = por %p93, %p94
      %p96 = scmp.ne.s32.totalorder %s82, %s83
      %p97 = scmp.eq.s32.totalorder %s23, 1
      %p98 = por %p96, %p97
      %p100 = scmp.ne.s32.totalorder %s83, %s99
      %p101 = scmp.eq.s32.totalorder %s23, 0
      %p102 = por %p100, %p101
      %s103 = ssub.s32 %s17, %s24
      %p104 = scmp.eq.s32.totalorder %s103, 0
      %s106 = sadd.s32 %s105, 1
      %s107 = scalar_select %p104, %s105, %s106
      %p110 = pneg %p104
      %p111 = scmp.eq.s32.totalorder %s17, 1
      %p112 = por %p110, %p111
      %p113 = scmp.ne.s32.totalorder %s105, %s108
      %p114 = scmp.eq.s32.totalorder %s17, 0
      %p115 = por %p113, %p114
      %p116 = scmp.ne.s32.totalorder %s105, %s108
      %p117 = scmp.eq.s32.totalorder %s22, 1
      %p118 = por %p116, %p117
      %p119 = scmp.ne.s32.totalorder %s108, %s109
      %p120 = scmp.eq.s32.totalorder %s22, 0
      %p121 = por %p119, %p120
      %p122 = scmp.ne.s32.totalorder %s108, %s109
      %p123 = scmp.eq.s32.totalorder %s23, 1
      %p124 = por %p122, %p123
      %p126 = scmp.ne.s32.totalorder %s109, %s125
      %p127 = scmp.eq.s32.totalorder %s23, 0
      %p128 = por %p126, %p127
      %s129 = ssub.s32 %s17, %s24
      %p130 = scmp.eq.s32.totalorder %s129, 0
      %s132 = sadd.s32 %s131, 1
      %s133 = scalar_select %p130, %s131, %s132
      %p136 = pneg %p130
      %p137 = scmp.eq.s32.totalorder %s17, 1
      %p138 = por %p136, %p137
      %p139 = scmp.ne.s32.totalorder %s131, %s134
      %p140 = scmp.eq.s32.totalorder %s17, 0
      %p141 = por %p139, %p140
      %p142 = scmp.ne.s32.totalorder %s131, %s134
      %p143 = scmp.eq.s32.totalorder %s22, 1
      %p144 = por %p142, %p143
      %p145 = scmp.ne.s32.totalorder %s134, %s135
      %p146 = scmp.eq.s32.totalorder %s22, 0
      %p147 = por %p145, %p146
      %p148 = scmp.ne.s32.totalorder %s134, %s135
      %p149 = scmp.eq.s32.totalorder %s23, 1
      %p150 = por %p148, %p149
      %p152 = scmp.ne.s32.totalorder %s135, %s151
      %p153 = scmp.eq.s32.totalorder %s23, 0
      %p154 = por %p152, %p153
      %s156 = sadd.s32 %s155, 1
      %p159 = scmp.eq.s32.totalorder %s17, 1
      %p160 = scmp.ne.s32.totalorder %s155, %s157
      %p161 = scmp.eq.s32.totalorder %s17, 0
      %p162 = por %p160, %p161
      %p163 = scmp.ne.s32.totalorder %s155, %s157
      %p164 = scmp.eq.s32.totalorder %s22, 1
      %p165 = por %p163, %p164
      %p166 = scmp.ne.s32.totalorder %s157, %s158
      %p167 = scmp.eq.s32.totalorder %s22, 0
      %p168 = por %p166, %p167
      %p169 = scmp.ne.s32.totalorder %s157, %s158
      %p170 = scmp.eq.s32.totalorder %s23, 1
      %p171 = por %p169, %p170
      %p173 = scmp.ne.s32.totalorder %s158, %s172
      %p174 = scmp.eq.s32.totalorder %s23, 0
      %p175 = por %p173, %p174
      %s177 = sadd.s32 %s176, 1
      %p180 = scmp.eq.s32.totalorder %s17, 1
      %p181 = scmp.ne.s32.totalorder %s176, %s178
      %p182 = scmp.eq.s32.totalorder %s17, 0
      %p183 = por %p181, %p182
      %p184 = scmp.ne.s32.totalorder %s176, %s178
      %p185 = scmp.eq.s32.totalorder %s22, 1
      %p186 = por %p184, %p185
      %p187 = scmp.ne.s32.totalorder %s178, %s179
      %p188 = scmp.eq.s32.totalorder %s22, 0
      %p189 = por %p187, %p188
      %p190 = scmp.ne.s32.totalorder %s178, %s179
      %p191 = scmp.eq.s32.totalorder %s23, 1
      %p192 = por %p190, %p191
      %p194 = scmp.ne.s32.totalorder %s179, %s193
      %p195 = scmp.eq.s32.totalorder %s23, 0
      %p196 = por %p194, %p195
      %s198 = sadd.s32 %s197, 1
      %p201 = scmp.eq.s32.totalorder %s17, 1
      %p202 = scmp.ne.s32.totalorder %s197, %s199
      %p203 = scmp.eq.s32.totalorder %s17, 0
      %p204 = por %p202, %p203
      %p205 = scmp.ne.s32.totalorder %s197, %s199
      %p206 = scmp.eq.s32.totalorder %s22, 1
      %p207 = por %p205, %p206
      %p208 = scmp.ne.s32.totalorder %s199, %s200
      %p209 = scmp.eq.s32.totalorder %s22, 0
      %p210 = por %p208, %p209
      %p211 = scmp.ne.s32.totalorder %s199, %s200
      %p212 = scmp.eq.s32.totalorder %s23, 1
      %p213 = por %p211, %p212
      %p215 = scmp.ne.s32.totalorder %s200, %s214
      %p216 = scmp.eq.s32.totalorder %s23, 0
      %p217 = por %p215, %p216
      %s218 = ssub.s32 %s17, %s24
      %p219 = scmp.eq.s32.totalorder %s218, 0
      %s221 = sadd.s32 %s220, 1
      %s222 = scalar_select %p219, %s220, %s221
      %p225 = pneg %p219
      %p226 = scmp.eq.s32.totalorder %s17, 1
      %p227 = por %p225, %p226
      %p228 = scmp.ne.s32.totalorder %s220, %s223
      %p229 = scmp.eq.s32.totalorder %s17, 0
      %p230 = por %p228, %p229
      %p231 = scmp.ne.s32.totalorder %s220, %s223
      %p232 = scmp.eq.s32.totalorder %s22, 1
      %p233 = por %p231, %p232
      %p234 = scmp.ne.s32.totalorder %s223, %s224
      %p235 = scmp.eq.s32.totalorder %s22, 0
      %p236 = por %p234, %p235
      %p237 = scmp.ne.s32.totalorder %s223, %s224
      %p238 = scmp.eq.s32.totalorder %s23, 1
      %p239 = por %p237, %p238
      %p241 = scmp.ne.s32.totalorder %s224, %s240
      %p242 = scmp.eq.s32.totalorder %s23, 0
      %p243 = por %p241, %p242
      %p244 = scmp.le.s32.totalorder 1, %s17
      %p245 = scmp.lt.s32.totalorder %s17, 3
      %p246 = pnand %p244, %p245
      %p247 = pneg %p246
      // Predicated region
      $region9: #{tpu_custom_call.1} parent=5 // pred_check
        _
      $region10: #{tpu_custom_call.1} parent=5 // pred_check_branch
        %249 = sbr.rel (%p246) target = $region12
      $region11: #{tpu_custom_call.1} parent=5 // pred_region
        %s250 = ssub.s32 %s17, 1
        // Predicated region
        $region13: #{tpu_custom_call.1} parent=11 // pred_check
          %p251 = pneg %p168
        $region14: #{tpu_custom_call.1} parent=11 // pred_check_branch
          %253 = sbr.rel (%p251) target = $region16
        $region15: #{tpu_custom_call.1} parent=11 // pred_region
          _
        $region16: #{tpu_custom_call.1} parent=11 // pred_fallthru
          _
        // Predicated region
        $region17: #{tpu_custom_call.1} parent=11 // pred_check
          %p254 = pneg %p189
        $region18: #{tpu_custom_call.1} parent=11 // pred_check_branch
          %256 = sbr.rel (%p254) target = $region20
        $region19: #{tpu_custom_call.1} parent=11 // pred_region
          _
        $region20: #{tpu_custom_call.1} parent=11 // pred_fallthru
          _
        // Predicated region
        $region21: #{tpu_custom_call.1} parent=11 // pred_check
          %p257 = pneg %p210
        $region22: #{tpu_custom_call.1} parent=11 // pred_check_branch
          %259 = sbr.rel (%p257) target = $region24
        $region23: #{tpu_custom_call.1} parent=11 // pred_region
          _
        $region24: #{tpu_custom_call.1} parent=11 // pred_fallthru
          _
      $region12: #{tpu_custom_call.1} parent=5 // pred_fallthru
        _
      %p260 = scmp.lt.s32.totalorder %s17, 2
      // Predicated region
      $region25: #{tpu_custom_call.1} parent=5 // pred_check
        %p261 = pneg %p260
      $region26: #{tpu_custom_call.1} parent=5 // pred_check_branch
        %263 = sbr.rel (%p261) target = $region28
      $region27: #{tpu_custom_call.1} parent=5 // pred_region
        // Predicated region
        $region29: #{tpu_custom_call.1} parent=27 // pred_check
          %p264 = pneg %p37
        $region30: #{tpu_custom_call.1} parent=27 // pred_check_branch
          %266 = sbr.rel (%p264) target = $region32
        $region31: #{tpu_custom_call.1} parent=27 // pred_region
          %s267 = smul.u32 4, %s17
          %p268 = scmp.lt.s32.totalorder %s267, 7
          %s269 = scalar_select %p268, %s267, 7
          %s270 = smul.addr %s269, 8
          %s271 = scalar_lea.vmem %s0, %s270
          %s272 = smul.u32 4, %s17
        $region32: #{tpu_custom_call.1} parent=27 // pred_fallthru
          _
        // Predicated region
        $region33: #{tpu_custom_call.1} parent=27 // pred_check
          %p273 = pneg %p63
        $region34: #{tpu_custom_call.1} parent=27 // pred_check_branch
          %275 = sbr.rel (%p273) target = $region36
        $region35: #{tpu_custom_call.1} parent=27 // pred_region
          %s276 = smul.u32 8, %s17
          %p277 = scmp.lt.s32.totalorder %s276, 15
          %s278 = scalar_select %p277, %s276, 15
          %s279 = smul.addr %s278, 8
          %s280 = scalar_lea.vmem %s1, %s279
          %s281 = smul.u32 8, %s17
        $region36: #{tpu_custom_call.1} parent=27 // pred_fallthru
          _
        // Predicated region
        $region37: #{tpu_custom_call.1} parent=27 // pred_check
          %p282 = pneg %p89
        $region38: #{tpu_custom_call.1} parent=27 // pred_check_branch
          %284 = sbr.rel (%p282) target = $region40
        $region39: #{tpu_custom_call.1} parent=27 // pred_region
          %s285 = smul.u32 8, %s17
          %p286 = scmp.lt.s32.totalorder %s285, 15
          %s287 = scalar_select %p286, %s285, 15
          %s288 = smul.addr %s287, 8
          %s289 = scalar_lea.vmem %s2, %s288
          %s290 = smul.u32 8, %s17
        $region40: #{tpu_custom_call.1} parent=27 // pred_fallthru
          _
        // Predicated region
        $region41: #{tpu_custom_call.1} parent=27 // pred_check
          %p291 = pneg %p115
        $region42: #{tpu_custom_call.1} parent=27 // pred_check_branch
          %293 = sbr.rel (%p291) target = $region44
        $region43: #{tpu_custom_call.1} parent=27 // pred_region
          %s294 = smul.u32 4, %s17
          %p295 = scmp.lt.s32.totalorder %s294, 7
          %s296 = scalar_select %p295, %s294, 7
          %s297 = smul.addr %s296, 8
          %s298 = scalar_lea.vmem %s3, %s297
          %s299 = smul.u32 4, %s17
        $region44: #{tpu_custom_call.1} parent=27 // pred_fallthru
          _
        // Predicated region
        $region45: #{tpu_custom_call.1} parent=27 // pred_check
          %p300 = pneg %p141
        $region46: #{tpu_custom_call.1} parent=27 // pred_check_branch
          %302 = sbr.rel (%p300) target = $region48
        $region47: #{tpu_custom_call.1} parent=27 // pred_region
          %p303 = scmp.lt.s32.totalorder %s17, 1
          %s304 = scalar_select %p303, %s17, 1
          %s305 = smul.addr %s304, 4
          %s306 = scalar_lea.vmem %s4, %s305
        $region48: #{tpu_custom_call.1} parent=27 // pred_fallthru
          _
      $region28: #{tpu_custom_call.1} parent=5 // pred_fallthru
        _
      %p307 = scmp.le.s32.totalorder 1, %s17
      %p308 = scmp.lt.s32.totalorder %s17, 3
      %p309 = pnand %p307, %p308
      %p310 = pneg %p309
      // Predicated region
      $region49: #{tpu_custom_call.1} parent=5 // pred_check
        _
      $region50: #{tpu_custom_call.1} parent=5 // pred_check_branch
        %312 = sbr.rel (%p309) target = $region52
      $region51: #{tpu_custom_call.1} parent=5 // pred_region
        %s313 = ssub.s32 %s17, 1
        %s314 = smul.u32 4, %s22
        %p315 = scmp.lt.s32.totalorder %s314, 7
        %s316 = scalar_select %p315, %s314, 7
        %s317 = smul.addr %s316, 8
        %s318 = scalar_lea.vmem %s0, %s317
        %p319 = pneg %p43
        %p320 = pneg %p40
        %s321 = smul.u32 8, %s22
        %p322 = scmp.lt.s32.totalorder %s321, 15
        %s323 = scalar_select %p322, %s321, 15
        %s324 = smul.addr %s323, 8
        %s325 = scalar_lea.vmem %s1, %s324
        %p326 = pneg %p69
        %p327 = pneg %p66
        %s328 = smul.u32 8, %s22
        %p329 = scmp.lt.s32.totalorder %s328, 15
        %s330 = scalar_select %p329, %s328, 15
        %s331 = smul.addr %s330, 8
        %s332 = scalar_lea.vmem %s2, %s331
        %p333 = pneg %p95
        %p334 = pneg %p92
        %s335 = smul.u32 4, %s22
        %p336 = scmp.lt.s32.totalorder %s335, 7
        %s337 = scalar_select %p336, %s335, 7
        %s338 = smul.addr %s337, 8
        %s339 = scalar_lea.vmem %s3, %s338
        %p340 = pneg %p121
        %p341 = pneg %p118
        %p342 = scmp.lt.s32.totalorder %s22, 1
        %s343 = scalar_select %p342, %s22, 1
        %s344 = smul.addr %s343, 4
        %s345 = scalar_lea.vmem %s4, %s344
        %p346 = pneg %p147
        %p347 = pneg %p144
        %p348 = pneg %p168
        %p349 = pneg %p165
        %p350 = pneg %p189
        %p351 = pneg %p186
        %p352 = pneg %p210
        %p353 = pneg %p207
        %p354 = pneg %p236
        %p355 = pneg %p233
        %s356 = sand.u32 %s223, 1
        %s357 = scalar_lea.sflag [#allocation3], %s356
        %s358 = sand.u32 %s223, 1
        %s359 = smul.addr %s358, 32
        %s360 = scalar_lea.vmem [#allocation2], %s359
        %s361 = smul.u32 4, %s22
        %p362 = scmp.lt.s32.totalorder %s361, 7
        %s363 = scalar_select %p362, %s361, 7
        %s364 = smul.addr %s363, 8
        %s365 = scalar_lea.vmem %s0, %s364
        %s366 = smul.u32 4, %s22
        %s367 = smul.u32 8, %s22
        %p368 = scmp.lt.s32.totalorder %s367, 15
        %s369 = scalar_select %p368, %s367, 15
        %s370 = smul.addr %s369, 8
        %s371 = scalar_lea.vmem %s1, %s370
        %s372 = smul.u32 8, %s22
        %s373 = smul.u32 8, %s22
        %p374 = scmp.lt.s32.totalorder %s373, 15
        %s375 = scalar_select %p374, %s373, 15
        %s376 = smul.addr %s375, 8
        %s377 = scalar_lea.vmem %s2, %s376
        %s378 = smul.u32 8, %s22
        %s379 = smul.u32 4, %s22
        %p380 = scmp.lt.s32.totalorder %s379, 7
        %s381 = scalar_select %p380, %s379, 7
        %s382 = smul.addr %s381, 8
        %s383 = scalar_lea.vmem %s3, %s382
        %s384 = smul.u32 4, %s22
        %p385 = scmp.lt.s32.totalorder %s22, 1
        %s386 = scalar_select %p385, %s22, 1
        %s387 = smul.addr %s386, 4
        %s388 = scalar_lea.vmem %s4, %s387
        %s389 = smul.u32 4, %s22
        %v390 = vld [vmem:[%s377] sm:$0xff]
        %v391 = vld [vmem:[%s377 + $0x8] sm:$0xff]
        %v392 = vld [vmem:[%s377 + $0x10] sm:$0xff]
        %v393 = vld [vmem:[%s377 + $0x18] sm:$0xff]
        %v394 = vld [vmem:[%s377 + $0x20] sm:$0xff]
        %v395 = vld [vmem:[%s377 + $0x28] sm:$0xff]
        %v396 = vld [vmem:[%s377 + $0x30] sm:$0xff]
        %v397 = vld [vmem:[%s377 + $0x38] sm:$0xff]
        %v398 = vld [vmem:[%s383] sm:$0xff]
        %v399 = vld [vmem:[%s383 + $0x8] sm:$0xff]
        %v400 = vld [vmem:[%s383 + $0x10] sm:$0xff]
        %v401 = vld [vmem:[%s383 + $0x18] sm:$0xff]
        %v402 = vld [vmem:[%s388] sm:$0x7]
        %v403 = vld [vmem:[%s365] sm:$0xff]
        %v404 = vld [vmem:[%s365 + $0x8] sm:$0xff]
        %v405 = vld [vmem:[%s365 + $0x10] sm:$0xff]
        %v406 = vld [vmem:[%s365 + $0x18] sm:$0xff]
        %v407 = vld [vmem:[%s5] sm:$0xff]
        %v408 = vld [vmem:[%s5 + $0x8] sm:$0xff]
        %v409 = vld [vmem:[%s5 + $0x10] sm:$0xff]
        %v410 = vld [vmem:[%s5 + $0x18] sm:$0xff]
        %v411 = vld [vmem:[%s5 + $0x20] sm:$0xff]
        %v412 = vld [vmem:[%s5 + $0x28] sm:$0xff]
        %v413 = vld [vmem:[%s5 + $0x30] sm:$0xff]
        %v414 = vld [vmem:[%s5 + $0x38] sm:$0xff]
        %v415 = vld [vmem:[%s5 + $0x40] sm:$0xff]
        %v416 = vld [vmem:[%s5 + $0x48] sm:$0xff]
        %v417 = vld [vmem:[%s5 + $0x50] sm:$0xff]
        %v418 = vld [vmem:[%s5 + $0x58] sm:$0xff]
        %v419 = vld [vmem:[%s5 + $0x60] sm:$0xff]
        %v420 = vld [vmem:[%s5 + $0x68] sm:$0xff]
        %v421 = vld [vmem:[%s5 + $0x70] sm:$0xff]
        %v422 = vld [vmem:[%s5 + $0x78] sm:$0xff]
        %v423 = vld [vmem:[%s7] sm:$0x1]
        %v424 = vld [vmem:[%s6] sm:$0xff]
        %v425 = vld [vmem:[%s6 + $0x8] sm:$0xff]
        %v426 = vld [vmem:[%s6 + $0x10] sm:$0xff]
        %v427 = vld [vmem:[%s6 + $0x18] sm:$0xff]
        %v428 = vld [vmem:[%s7 + $0x1] sm:$0x1]
        %v429 = vlaneseq
        %v430 = vshrl.u32 %v429, 7
        %v431 = vsub.s32 0, %v430
        %v432 = vrot.slane %v423, %v431
        %433 = vmatprep.subr.mxu0 0.0
        %434 = vmatpush1.msra.mxu0 %v422
        %435 = vmatprep.subr.mxu0 0.0
        %436 = vmatpush1.msra.mxu0 %v421
        %437 = vmatprep.subr.mxu0 0.0
        %438 = vmatpush1.msra.mxu0 %v420
        %439 = vmatprep.subr.mxu0 0.0
        %440 = vmatpush1.msra.mxu0 %v419
        %441 = vmatprep.subr.mxu0 0.0
        %442 = vmatpush1.msra.mxu0 %v418
        %443 = vmatprep.subr.mxu0 0.0
        %444 = vmatpush1.msra.mxu0 %v417
        %445 = vmatprep.subr.mxu0 0.0
        %446 = vmatpush1.msra.mxu0 %v416
        %447 = vmatprep.subr.mxu0 0.0
        %448 = vmatpush1.msra.mxu0 %v415
        %449 = vmatprep.subr.mxu0 0.0
        %450 = vmatpush1.msra.mxu0 %v414
        %451 = vmatprep.subr.mxu0 0.0
        %452 = vmatpush1.msra.mxu0 %v413
        %453 = vmatprep.subr.mxu0 0.0
        %454 = vmatpush1.msra.mxu0 %v412
        %455 = vmatprep.subr.mxu0 0.0
        %456 = vmatpush1.msra.mxu0 %v411
        %457 = vmatprep.subr.mxu0 0.0
        %458 = vmatpush1.msra.mxu0 %v410
        %459 = vmatprep.subr.mxu0 0.0
        %460 = vmatpush1.msra.mxu0 %v409
        %461 = vmatprep.subr.mxu0 0.0
        %462 = vmatpush1.msra.mxu0 %v408
        %463 = vmatprep.subr.mxu0 0.0
        %464 = vmatpush1.msra.mxu0 %v407
        %465 = vmatprep.subr.mxu0 0.0
        %466 = vmatpush2.msra.mxu0 0.0
        %467 = vmatprep.subr.mxu0 0.0
        %468 = vmatpush2.msra.mxu0 0.0
        %469 = vmatprep.subr.mxu0 0.0
        %470 = vmatpush2.msra.mxu0 0.0
        %471 = vmatprep.subr.mxu0 0.0
        %472 = vmatpush2.msra.mxu0 0.0
        %473 = vmatprep.subr.mxu0 0.0
        %474 = vmatpush2.msra.mxu0 0.0
        %475 = vmatprep.subr.mxu0 0.0
        %476 = vmatpush2.msra.mxu0 0.0
        %477 = vmatprep.subr.mxu0 0.0
        %478 = vmatpush2.msra.mxu0 0.0
        %479 = vmatprep.subr.mxu0 0.0
        %480 = vmatpush2.msra.mxu0 0.0
        %481 = vmatprep.subr.mxu0 0.0
        %482 = vmatpush2.msra.mxu0 0.0
        %483 = vmatprep.subr.mxu0 0.0
        %484 = vmatpush2.msra.mxu0 0.0
        %485 = vmatprep.subr.mxu0 0.0
        %486 = vmatpush2.msra.mxu0 0.0
        %487 = vmatprep.subr.mxu0 0.0
        %488 = vmatpush2.msra.mxu0 0.0
        %489 = vmatprep.subr.mxu0 0.0
        %490 = vmatpush2.msra.mxu0 0.0
        %491 = vmatprep.subr.mxu0 0.0
        %492 = vmatpush2.msra.mxu0 0.0
        %493 = vmatprep.subr.mxu0 0.0
        %494 = vmatpush2.msra.mxu0 0.0
        %495 = vmatprep.subr.mxu0 0.0
        %496 = vmatpush2.msra.mxu0 0.0
        %497 = vmatprep.mubr.f32.mxu0 0.0
        %498 = vmatmul.mubr.f32.gmra.mxu0 %v403
        %v499 = vpop.f32.mrf.mxu0
        %v500 = vadd.f32 %v432, %v499
        %v501 = vpop.f32.mrf.mxu0
        %502 = vmatprep.mubr.f32.mxu0 0.0
        %503 = vmatmul.mubr.f32.gmra.mxu0 %v404
        %v504 = vpop.f32.mrf.mxu0
        %v505 = vadd.f32 %v432, %v504
        %v506 = vpop.f32.mrf.mxu0
        %507 = vmatprep.mubr.f32.mxu0 0.0
        %508 = vmatmul.mubr.f32.gmra.mxu0 %v405
        %v509 = vpop.f32.mrf.mxu0
        %v510 = vadd.f32 %v432, %v509
        %v511 = vpop.f32.mrf.mxu0
        %512 = vmatprep.mubr.f32.mxu0 0.0
        %513 = vmatmul.mubr.f32.gmra.mxu0 %v406
        %v514 = vpop.f32.mrf.mxu0
        %v515 = vadd.f32 %v432, %v514
        %v516 = vpop.f32.mrf.mxu0
        %517 = vdwg.mxu0
        %v518 = vmax.f32 %v500, 0.0
        %v519 = vmax.f32 %v505, 0.0
        %v520 = vmax.f32 %v510, 0.0
        %v521 = vmax.f32 %v515, 0.0
        %v522 = vlaneseq
        %v523 = vshrl.u32 %v522, 7
        %v524 = vsub.s32 0, %v523
        %v525 = vrot.slane %v428, %v524
        %vm526 = vcmask 261120
        %v528 = vsel %vm526, %v518, 0
        %v531 = vsel %vm526, %v519, 0
        %v534 = vsel %vm526, %v520, 0
        %v537 = vsel %vm526, %v521, 0
        %539 = vmatprep.subr.mxu0 0.0
        %540 = vmatpush1.msra.mxu0 0.0
        %541 = vmatprep.subr.mxu0 0.0
        %542 = vmatpush1.msra.mxu0 0.0
        %543 = vmatprep.subr.mxu0 0.0
        %544 = vmatpush1.msra.mxu0 0.0
        %545 = vmatprep.subr.mxu0 0.0
        %546 = vmatpush1.msra.mxu0 0.0
        %547 = vmatprep.subr.mxu0 0.0
        %548 = vmatpush1.msra.mxu0 0.0
        %549 = vmatprep.subr.mxu0 0.0
        %550 = vmatpush1.msra.mxu0 0.0
        %551 = vmatprep.subr.mxu0 0.0
        %552 = vmatpush1.msra.mxu0 0.0
        %553 = vmatprep.subr.mxu0 0.0
        %554 = vmatpush1.msra.mxu0 0.0
        %555 = vmatprep.subr.mxu0 0.0
        %556 = vmatpush1.msra.mxu0 0.0
        %557 = vmatprep.subr.mxu0 0.0
        %558 = vmatpush1.msra.mxu0 0.0
        %559 = vmatprep.subr.mxu0 0.0
        %560 = vmatpush1.msra.mxu0 0.0
        %561 = vmatprep.subr.mxu0 0.0
        %562 = vmatpush1.msra.mxu0 0.0
        %563 = vmatprep.subr.mxu0 0.0
        %564 = vmatpush1.msra.mxu0 %v427
        %565 = vmatprep.subr.mxu0 0.0
        %566 = vmatpush1.msra.mxu0 %v426
        %567 = vmatprep.subr.mxu0 0.0
        %568 = vmatpush1.msra.mxu0 %v425
        %569 = vmatprep.subr.mxu0 0.0
        %570 = vmatpush1.msra.mxu0 %v424
        %571 = vmatprep.subr.mxu0 0.0
        %572 = vmatpush2.msra.mxu0 0.0
        %573 = vmatprep.subr.mxu0 0.0
        %574 = vmatpush2.msra.mxu0 0.0
        %575 = vmatprep.subr.mxu0 0.0
        %576 = vmatpush2.msra.mxu0 0.0
        %577 = vmatprep.subr.mxu0 0.0
        %578 = vmatpush2.msra.mxu0 0.0
        %579 = vmatprep.subr.mxu0 0.0
        %580 = vmatpush2.msra.mxu0 0.0
        %581 = vmatprep.subr.mxu0 0.0
        %582 = vmatpush2.msra.mxu0 0.0
        %583 = vmatprep.subr.mxu0 0.0
        %584 = vmatpush2.msra.mxu0 0.0
        %585 = vmatprep.subr.mxu0 0.0
        %586 = vmatpush2.msra.mxu0 0.0
        %587 = vmatprep.subr.mxu0 0.0
        %588 = vmatpush2.msra.mxu0 0.0
        %589 = vmatprep.subr.mxu0 0.0
        %590 = vmatpush2.msra.mxu0 0.0
        %591 = vmatprep.subr.mxu0 0.0
        %592 = vmatpush2.msra.mxu0 0.0
        %593 = vmatprep.subr.mxu0 0.0
        %594 = vmatpush2.msra.mxu0 0.0
        %595 = vmatprep.subr.mxu0 0.0
        %596 = vmatpush2.msra.mxu0 0.0
        %597 = vmatprep.subr.mxu0 0.0
        %598 = vmatpush2.msra.mxu0 0.0
        %599 = vmatprep.subr.mxu0 0.0
        %600 = vmatpush2.msra.mxu0 0.0
        %601 = vmatprep.subr.mxu0 0.0
        %602 = vmatpush2.msra.mxu0 0.0
        %603 = vmatprep.mubr.f32.mxu0 0.0
        %604 = vmatmul.mubr.f32.gmra.mxu0 %v528
        %v605 = vpop.f32.mrf.mxu0
        %v606 = vadd.f32 %v525, %v605
        %v607 = vpop.f32.mrf.mxu0
        %608 = vmatprep.mubr.f32.mxu0 0.0
        %609 = vmatmul.mubr.f32.gmra.mxu0 %v531
        %v610 = vpop.f32.mrf.mxu0
        %v611 = vadd.f32 %v525, %v610
        %v612 = vpop.f32.mrf.mxu0
        %613 = vmatprep.mubr.f32.mxu0 0.0
        %614 = vmatmul.mubr.f32.gmra.mxu0 %v534
        %v615 = vpop.f32.mrf.mxu0
        %v616 = vadd.f32 %v525, %v615
        %v617 = vpop.f32.mrf.mxu0
        %618 = vmatprep.mubr.f32.mxu0 0.0
        %619 = vmatmul.mubr.f32.gmra.mxu0 %v537
        %v620 = vpop.f32.mrf.mxu0
        %v621 = vadd.f32 %v525, %v620
        %v622 = vpop.f32.mrf.mxu0
        %623 = vdwg.mxu0
        %v624 = vmul.f32 %v606, 0.17677669
        %v625 = vmul.f32 %v611, 0.17677669
        %v626 = vmul.f32 %v616, 0.17677669
        %v627 = vmul.f32 %v621, 0.17677669
        %v628 = vld [vmem:[%s371] sm:$0xff]
        %v629 = vld [vmem:[%s371 + $0x8] sm:$0xff]
        %v630 = vld [vmem:[%s371 + $0x10] sm:$0xff]
        %v631 = vld [vmem:[%s371 + $0x18] sm:$0xff]
        %v632 = vld [vmem:[%s371 + $0x20] sm:$0xff]
        %v633 = vld [vmem:[%s371 + $0x28] sm:$0xff]
        %v634 = vld [vmem:[%s371 + $0x30] sm:$0xff]
        %v635 = vld [vmem:[%s371 + $0x38] sm:$0xff]
        %s636 = scalar_lea.vmem %s5, 128
        %v637 = vld [vmem:[%s636] sm:$0xff]
        %v638 = vld [vmem:[%s636 + $0x8] sm:$0xff]
        %v639 = vld [vmem:[%s636 + $0x10] sm:$0xff]
        %v640 = vld [vmem:[%s636 + $0x18] sm:$0xff]
        %v641 = vld [vmem:[%s636 + $0x20] sm:$0xff]
        %v642 = vld [vmem:[%s636 + $0x28] sm:$0xff]
        %v643 = vld [vmem:[%s636 + $0x30] sm:$0xff]
        %v644 = vld [vmem:[%s636 + $0x38] sm:$0xff]
        %v645 = vld [vmem:[%s636 + $0x40] sm:$0xff]
        %v646 = vld [vmem:[%s636 + $0x48] sm:$0xff]
        %v647 = vld [vmem:[%s636 + $0x50] sm:$0xff]
        %v648 = vld [vmem:[%s636 + $0x58] sm:$0xff]
        %v649 = vld [vmem:[%s636 + $0x60] sm:$0xff]
        %v650 = vld [vmem:[%s636 + $0x68] sm:$0xff]
        %v651 = vld [vmem:[%s636 + $0x70] sm:$0xff]
        %v652 = vld [vmem:[%s636 + $0x78] sm:$0xff]
        %v653 = vld [vmem:[%s7 + $0x2] sm:$0x1]
        %s654 = scalar_lea.vmem %s6, 32
        %v655 = vld [vmem:[%s654] sm:$0xff]
        %v656 = vld [vmem:[%s654 + $0x8] sm:$0xff]
        %v657 = vld [vmem:[%s654 + $0x10] sm:$0xff]
        %v658 = vld [vmem:[%s654 + $0x18] sm:$0xff]
        %v659 = vld [vmem:[%s7 + $0x3] sm:$0x1]
        %v660 = vlaneseq
        %v661 = vshrl.u32 %v660, 7
        %v662 = vsub.s32 0, %v661
        %v663 = vrot.slane %v653, %v662
        %664 = vmatprep.subr.mxu0 0.0
        %665 = vmatpush1.msra.mxu0 %v652
        %666 = vmatprep.subr.mxu0 0.0
        %667 = vmatpush1.msra.mxu0 %v651
        %668 = vmatprep.subr.mxu0 0.0
        %669 = vmatpush1.msra.mxu0 %v650
        %670 = vmatprep.subr.mxu0 0.0
        %671 = vmatpush1.msra.mxu0 %v649
        %672 = vmatprep.subr.mxu0 0.0
        %673 = vmatpush1.msra.mxu0 %v648
        %674 = vmatprep.subr.mxu0 0.0
        %675 = vmatpush1.msra.mxu0 %v647
        %676 = vmatprep.subr.mxu0 0.0
        %677 = vmatpush1.msra.mxu0 %v646
        %678 = vmatprep.subr.mxu0 0.0
        %679 = vmatpush1.msra.mxu0 %v645
        %680 = vmatprep.subr.mxu0 0.0
        %681 = vmatpush1.msra.mxu0 %v644
        %682 = vmatprep.subr.mxu0 0.0
        %683 = vmatpush1.msra.mxu0 %v643
        %684 = vmatprep.subr.mxu0 0.0
        %685 = vmatpush1.msra.mxu0 %v642
        %686 = vmatprep.subr.mxu0 0.0
        %687 = vmatpush1.msra.mxu0 %v641
        %688 = vmatprep.subr.mxu0 0.0
        %689 = vmatpush1.msra.mxu0 %v640
        %690 = vmatprep.subr.mxu0 0.0
        %691 = vmatpush1.msra.mxu0 %v639
        %692 = vmatprep.subr.mxu0 0.0
        %693 = vmatpush1.msra.mxu0 %v638
        %694 = vmatprep.subr.mxu0 0.0
        %695 = vmatpush1.msra.mxu0 %v637
        %696 = vmatprep.subr.mxu0 0.0
        %697 = vmatpush2.msra.mxu0 0.0
        %698 = vmatprep.subr.mxu0 0.0
        %699 = vmatpush2.msra.mxu0 0.0
        %700 = vmatprep.subr.mxu0 0.0
        %701 = vmatpush2.msra.mxu0 0.0
        %702 = vmatprep.subr.mxu0 0.0
        %703 = vmatpush2.msra.mxu0 0.0
        %704 = vmatprep.subr.mxu0 0.0
        %705 = vmatpush2.msra.mxu0 0.0
        %706 = vmatprep.subr.mxu0 0.0
        %707 = vmatpush2.msra.mxu0 0.0
        %708 = vmatprep.subr.mxu0 0.0
        %709 = vmatpush2.msra.mxu0 0.0
        %710 = vmatprep.subr.mxu0 0.0
        %711 = vmatpush2.msra.mxu0 0.0
        %712 = vmatprep.subr.mxu0 0.0
        %713 = vmatpush2.msra.mxu0 0.0
        %714 = vmatprep.subr.mxu0 0.0
        %715 = vmatpush2.msra.mxu0 0.0
        %716 = vmatprep.subr.mxu0 0.0
        %717 = vmatpush2.msra.mxu0 0.0
        %718 = vmatprep.subr.mxu0 0.0
        %719 = vmatpush2.msra.mxu0 0.0
        %720 = vmatprep.subr.mxu0 0.0
        %721 = vmatpush2.msra.mxu0 0.0
        %722 = vmatprep.subr.mxu0 0.0
        %723 = vmatpush2.msra.mxu0 0.0
        %724 = vmatprep.subr.mxu0 0.0
        %725 = vmatpush2.msra.mxu0 0.0
        %726 = vmatprep.subr.mxu0 0.0
        %727 = vmatpush2.msra.mxu0 0.0
        %728 = vmatprep.mubr.f32.mxu0 0.0
        %729 = vmatmul.mubr.f32.gmra.mxu0 %v628
        %v730 = vpop.f32.mrf.mxu0
        %v731 = vadd.f32 %v663, %v730
        %v732 = vpop.f32.mrf.mxu0
        %733 = vmatprep.mubr.f32.mxu0 0.0
        %734 = vmatmul.mubr.f32.gmra.mxu0 %v629
        %v735 = vpop.f32.mrf.mxu0
        %v736 = vadd.f32 %v663, %v735
        %v737 = vpop.f32.mrf.mxu0
        %738 = vmatprep.mubr.f32.mxu0 0.0
        %739 = vmatmul.mubr.f32.gmra.mxu0 %v630
        %v740 = vpop.f32.mrf.mxu0
        %v741 = vadd.f32 %v663, %v740
        %v742 = vpop.f32.mrf.mxu0
        %743 = vmatprep.mubr.f32.mxu0 0.0
        %744 = vmatmul.mubr.f32.gmra.mxu0 %v631
        %v745 = vpop.f32.mrf.mxu0
        %v746 = vadd.f32 %v663, %v745
        %v747 = vpop.f32.mrf.mxu0
        %748 = vmatprep.mubr.f32.mxu0 0.0
        %749 = vmatmul.mubr.f32.gmra.mxu0 %v632
        %v750 = vpop.f32.mrf.mxu0
        %v751 = vadd.f32 %v663, %v750
        %v752 = vpop.f32.mrf.mxu0
        %753 = vmatprep.mubr.f32.mxu0 0.0
        %754 = vmatmul.mubr.f32.gmra.mxu0 %v633
        %v755 = vpop.f32.mrf.mxu0
        %v756 = vadd.f32 %v663, %v755
        %v757 = vpop.f32.mrf.mxu0
        %758 = vmatprep.mubr.f32.mxu0 0.0
        %759 = vmatmul.mubr.f32.gmra.mxu0 %v634
        %v760 = vpop.f32.mrf.mxu0
        %v761 = vadd.f32 %v663, %v760
        %v762 = vpop.f32.mrf.mxu0
        %763 = vmatprep.mubr.f32.mxu0 0.0
        %764 = vmatmul.mubr.f32.gmra.mxu0 %v635
        %v765 = vpop.f32.mrf.mxu0
        %v766 = vadd.f32 %v663, %v765
        %v767 = vpop.f32.mrf.mxu0
        %768 = vdwg.mxu0
        %v769 = vmax.f32 %v731, 0.0
        %v770 = vmax.f32 %v736, 0.0
        %v771 = vmax.f32 %v741, 0.0
        %v772 = vmax.f32 %v746, 0.0
        %v773 = vmax.f32 %v751, 0.0
        %v774 = vmax.f32 %v756, 0.0
        %v775 = vmax.f32 %v761, 0.0
        %v776 = vmax.f32 %v766, 0.0
        %v777 = vlaneseq
        %v778 = vshrl.u32 %v777, 7
        %v779 = vsub.s32 0, %v778
        %v780 = vrot.slane %v659, %v779
        %v782 = vsel %vm526, %v769, 0
        %v785 = vsel %vm526, %v770, 0
        %v788 = vsel %vm526, %v771, 0
        %v791 = vsel %vm526, %v772, 0
        %v794 = vsel %vm526, %v773, 0
        %v797 = vsel %vm526, %v774, 0
        %v800 = vsel %vm526, %v775, 0
        %v803 = vsel %vm526, %v776, 0
        %805 = vmatprep.subr.mxu0 0.0
        %806 = vmatpush1.msra.mxu0 0.0
        %807 = vmatprep.subr.mxu0 0.0
        %808 = vmatpush1.msra.mxu0 0.0
        %809 = vmatprep.subr.mxu0 0.0
        %810 = vmatpush1.msra.mxu0 0.0
        %811 = vmatprep.subr.mxu0 0.0
        %812 = vmatpush1.msra.mxu0 0.0
        %813 = vmatprep.subr.mxu0 0.0
        %814 = vmatpush1.msra.mxu0 0.0
        %815 = vmatprep.subr.mxu0 0.0
        %816 = vmatpush1.msra.mxu0 0.0
        %817 = vmatprep.subr.mxu0 0.0
        %818 = vmatpush1.msra.mxu0 0.0
        %819 = vmatprep.subr.mxu0 0.0
        %820 = vmatpush1.msra.mxu0 0.0
        %821 = vmatprep.subr.mxu0 0.0
        %822 = vmatpush1.msra.mxu0 0.0
        %823 = vmatprep.subr.mxu0 0.0
        %824 = vmatpush1.msra.mxu0 0.0
        %825 = vmatprep.subr.mxu0 0.0
        %826 = vmatpush1.msra.mxu0 0.0
        %827 = vmatprep.subr.mxu0 0.0
        %828 = vmatpush1.msra.mxu0 0.0
        %829 = vmatprep.subr.mxu0 0.0
        %830 = vmatpush1.msra.mxu0 %v658
        %831 = vmatprep.subr.mxu0 0.0
        %832 = vmatpush1.msra.mxu0 %v657
        %833 = vmatprep.subr.mxu0 0.0
        %834 = vmatpush1.msra.mxu0 %v656
        %835 = vmatprep.subr.mxu0 0.0
        %836 = vmatpush1.msra.mxu0 %v655
        %837 = vmatprep.subr.mxu0 0.0
        %838 = vmatpush2.msra.mxu0 0.0
        %839 = vmatprep.subr.mxu0 0.0
        %840 = vmatpush2.msra.mxu0 0.0
        %841 = vmatprep.subr.mxu0 0.0
        %842 = vmatpush2.msra.mxu0 0.0
        %843 = vmatprep.subr.mxu0 0.0
        %844 = vmatpush2.msra.mxu0 0.0
        %845 = vmatprep.subr.mxu0 0.0
        %846 = vmatpush2.msra.mxu0 0.0
        %847 = vmatprep.subr.mxu0 0.0
        %848 = vmatpush2.msra.mxu0 0.0
        %849 = vmatprep.subr.mxu0 0.0
        %850 = vmatpush2.msra.mxu0 0.0
        %851 = vmatprep.subr.mxu0 0.0
        %852 = vmatpush2.msra.mxu0 0.0
        %853 = vmatprep.subr.mxu0 0.0
        %854 = vmatpush2.msra.mxu0 0.0
        %855 = vmatprep.subr.mxu0 0.0
        %856 = vmatpush2.msra.mxu0 0.0
        %857 = vmatprep.subr.mxu0 0.0
        %858 = vmatpush2.msra.mxu0 0.0
        %859 = vmatprep.subr.mxu0 0.0
        %860 = vmatpush2.msra.mxu0 0.0
        %861 = vmatprep.subr.mxu0 0.0
        %862 = vmatpush2.msra.mxu0 0.0
        %863 = vmatprep.subr.mxu0 0.0
        %864 = vmatpush2.msra.mxu0 0.0
        %865 = vmatprep.subr.mxu0 0.0
        %866 = vmatpush2.msra.mxu0 0.0
        %867 = vmatprep.subr.mxu0 0.0
        %868 = vmatpush2.msra.mxu0 0.0
        %869 = vmatprep.mubr.f32.mxu0 0.0
        %870 = vmatmul.mubr.f32.gmra.mxu0 %v782
        %v871 = vpop.f32.mrf.mxu0
        %v872 = vadd.f32 %v780, %v871
        %v873 = vpop.f32.mrf.mxu0
        %874 = vmatprep.mubr.f32.mxu0 0.0
        %875 = vmatmul.mubr.f32.gmra.mxu0 %v785
        %v876 = vpop.f32.mrf.mxu0
        %v877 = vadd.f32 %v780, %v876
        %v878 = vpop.f32.mrf.mxu0
        %879 = vmatprep.mubr.f32.mxu0 0.0
        %880 = vmatmul.mubr.f32.gmra.mxu0 %v788
        %v881 = vpop.f32.mrf.mxu0
        %v882 = vadd.f32 %v780, %v881
        %v883 = vpop.f32.mrf.mxu0
        %884 = vmatprep.mubr.f32.mxu0 0.0
        %885 = vmatmul.mubr.f32.gmra.mxu0 %v791
        %v886 = vpop.f32.mrf.mxu0
        %v887 = vadd.f32 %v780, %v886
        %v888 = vpop.f32.mrf.mxu0
        %889 = vmatprep.mubr.f32.mxu0 0.0
        %890 = vmatmul.mubr.f32.gmra.mxu0 %v794
        %v891 = vpop.f32.mrf.mxu0
        %v892 = vadd.f32 %v780, %v891
        %v893 = vpop.f32.mrf.mxu0
        %894 = vmatprep.mubr.f32.mxu0 0.0
        %895 = vmatmul.mubr.f32.gmra.mxu0 %v797
        %v896 = vpop.f32.mrf.mxu0
        %v897 = vadd.f32 %v780, %v896
        %v898 = vpop.f32.mrf.mxu0
        %899 = vmatprep.mubr.f32.mxu0 0.0
        %900 = vmatmul.mubr.f32.gmra.mxu0 %v800
        %v901 = vpop.f32.mrf.mxu0
        %v902 = vadd.f32 %v780, %v901
        %v903 = vpop.f32.mrf.mxu0
        %904 = vmatprep.mubr.f32.mxu0 0.0
        %905 = vmatmul.mubr.f32.gmra.mxu0 %v803
        %v906 = vpop.f32.mrf.mxu0
        %v907 = vadd.f32 %v780, %v906
        %v908 = vpop.f32.mrf.mxu0
        %909 = vdwg.mxu0
        %v910 = vadd.f32 %v872, %v390
        %v911 = vadd.f32 %v877, %v391
        %v912 = vadd.f32 %v882, %v392
        %v913 = vadd.f32 %v887, %v393
        %v914 = vadd.f32 %v892, %v394
        %v915 = vadd.f32 %v897, %v395
        %v916 = vadd.f32 %v902, %v396
        %v917 = vadd.f32 %v907, %v397
        %919 = vset.pattern.permute.xlu0 1
        %920 = vperm.xlu0 %919, %v398
        %v921 = vpop.permute.xlu0 %920
        %924 = vset.pattern.permute.xlu0 1
        %925 = vperm.xlu0 %924, %v399
        %v926 = vpop.permute.xlu0 %925
        %929 = vset.pattern.permute.xlu0 1
        %930 = vperm.xlu0 %929, %v400
        %v931 = vpop.permute.xlu0 %930
        %934 = vset.pattern.permute.xlu0 1
        %935 = vperm.xlu0 %934, %v401
        %v936 = vpop.permute.xlu0 %935
        %v938 = vlaneseq
        %v939 = vshrl.u32 %v938, 7
        %v940 = vsub.s32 1, %v939
        %v941 = vrot.slane %v402, %v940
        %v942 = vsub.f32 %v921, %v941
        %v943 = vsub.f32 %v926, %v941
        %v944 = vsub.f32 %v931, %v941
        %v945 = vsub.f32 %v936, %v941
        %946 = vset.pattern.permute.xlu0 2
        %947 = vperm.xlu0 %946, %v398
        %v948 = vpop.permute.xlu0 %947
        %950 = vset.pattern.permute.xlu0 2
        %951 = vperm.xlu0 %950, %v399
        %v952 = vpop.permute.xlu0 %951
        %954 = vset.pattern.permute.xlu0 2
        %955 = vperm.xlu0 %954, %v400
        %v956 = vpop.permute.xlu0 %955
        %958 = vset.pattern.permute.xlu0 2
        %959 = vperm.xlu0 %958, %v401
        %v960 = vpop.permute.xlu0 %959
        %v962 = vlaneseq
        %v963 = vshrl.u32 %v962, 7
        %v964 = vsub.s32 2, %v963
        %v965 = vrot.slane %v402, %v964
        %v966 = vsub.f32 %v948, %v965
        %v967 = vsub.f32 %v952, %v965
        %v968 = vsub.f32 %v956, %v965
        %v969 = vsub.f32 %v960, %v965
        %v970 = vmul.f32 %v942, %v942
        %v971 = vmul.f32 %v943, %v943
        %v972 = vmul.f32 %v944, %v944
        %v973 = vmul.f32 %v945, %v945
        %v974 = vmul.f32 %v966, %v966
        %v975 = vmul.f32 %v967, %v967
        %v976 = vmul.f32 %v968, %v968
        %v977 = vmul.f32 %v969, %v969
        %v978 = vadd.f32 %v970, %v974
        %v979 = vadd.f32 %v971, %v975
        %v980 = vadd.f32 %v972, %v976
        %v981 = vadd.f32 %v973, %v977
        %982 = vset.pattern.permute.xlu0 0
        %983 = vperm.xlu0 %982, %v398
        %v984 = vpop.permute.xlu0 %983
        %986 = vset.pattern.permute.xlu0 0
        %987 = vperm.xlu0 %986, %v399
        %v988 = vpop.permute.xlu0 %987
        %990 = vset.pattern.permute.xlu0 0
        %991 = vperm.xlu0 %990, %v400
        %v992 = vpop.permute.xlu0 %991
        %994 = vset.pattern.permute.xlu0 0
        %995 = vperm.xlu0 %994, %v401
        %v996 = vpop.permute.xlu0 %995
        %v998 = vlaneseq
        %v999 = vshrl.u32 %v998, 7
        %v1000 = vsub.s32 0, %v999
        %v1001 = vrot.slane %v402, %v1000
        %vm1002 = vcmp.eq.f32.partialorder %v984, %v1001
        %vm1003 = vcmp.eq.f32.partialorder %v988, %v1001
        %vm1004 = vcmp.eq.f32.partialorder %v992, %v1001
        %vm1005 = vcmp.eq.f32.partialorder %v996, %v1001
        %v1006 = vsel %vm1002, %v978, 1e+30
        %v1007 = vsel %vm1003, %v979, 1e+30
        %v1008 = vsel %vm1004, %v980, 1e+30
        %v1009 = vsel %vm1005, %v981, 1e+30
        %v1010 = vlaneseq
        %v1011 = vand.u32 %v1010, 127
        %v1016 = vand.u32 %v1006, 4294967232
        %v1017 = vand.u32 %v1007, 4294967232
        %v1018 = vand.u32 %v1008, 4294967232
        %v1019 = vand.u32 %v1009, 4294967232
        %v1020 = vor.u32 %v1016, %v1011
        %v1021 = vor.u32 %v1017, %v1011
        %v1022 = vor.u32 %v1018, %v1011
        %v1023 = vor.u32 %v1019, %v1011
        %vm1024 = vcmask 523264
        %v1025 = vsel %vm1024, %v1020, 2147483647
        %v1026 = vand.u32 %v1025, 65535
        %v1027 = vshra.s32 %v1025, 16
        %v1028 = vcvt.s32.f32 %v1026
        %v1029 = vcvt.s32.f32 %v1027
        %1030 = vmin.xlane.f32.xlu0 %v1029
        %v1031 = vpop.xlane.xlu0 %1030
        %vm1032 = vcmp.eq.f32.partialorder %v1029, %v1031
        %v1033 = vsel %vm1032, %v1028, inf
        %1034 = vmin.xlane.f32.xlu0 %v1033
        %v1035 = vpop.xlane.xlu0 %1034
        %v1036 = vcvt.f32.s32 %v1035
        %v1037 = vcvt.f32.s32 %v1031
        %v1038 = vshll.u32 %v1037, 16
        %v1039 = vadd.s32 %v1038, %v1036
        %v1040 = vsel %vm1024, %v1021, 2147483647
        %v1041 = vand.u32 %v1040, 65535
        %v1042 = vshra.s32 %v1040, 16
        %v1043 = vcvt.s32.f32 %v1041
        %v1044 = vcvt.s32.f32 %v1042
        %1045 = vmin.xlane.f32.xlu0 %v1044
        %v1046 = vpop.xlane.xlu0 %1045
        %vm1047 = vcmp.eq.f32.partialorder %v1044, %v1046
        %v1048 = vsel %vm1047, %v1043, inf
        %1049 = vmin.xlane.f32.xlu0 %v1048
        %v1050 = vpop.xlane.xlu0 %1049
        %v1051 = vcvt.f32.s32 %v1050
        %v1052 = vcvt.f32.s32 %v1046
        %v1053 = vshll.u32 %v1052, 16
        %v1054 = vadd.s32 %v1053, %v1051
        %v1055 = vsel %vm1024, %v1022, 2147483647
        %v1056 = vand.u32 %v1055, 65535
        %v1057 = vshra.s32 %v1055, 16
        %v1058 = vcvt.s32.f32 %v1056
        %v1059 = vcvt.s32.f32 %v1057
        %1060 = vmin.xlane.f32.xlu0 %v1059
        %v1061 = vpop.xlane.xlu0 %1060
        %vm1062 = vcmp.eq.f32.partialorder %v1059, %v1061
        %v1063 = vsel %vm1062, %v1058, inf
        %1064 = vmin.xlane.f32.xlu0 %v1063
        %v1065 = vpop.xlane.xlu0 %1064
        %v1066 = vcvt.f32.s32 %v1065
        %v1067 = vcvt.f32.s32 %v1061
        %v1068 = vshll.u32 %v1067, 16
        %v1069 = vadd.s32 %v1068, %v1066
        %v1070 = vsel %vm1024, %v1023, 2147483647
        %v1071 = vand.u32 %v1070, 65535
        %v1072 = vshra.s32 %v1070, 16
        %v1073 = vcvt.s32.f32 %v1071
        %v1074 = vcvt.s32.f32 %v1072
        %1075 = vmin.xlane.f32.xlu0 %v1074
        %v1076 = vpop.xlane.xlu0 %1075
        %vm1077 = vcmp.eq.f32.partialorder %v1074, %v1076
        %v1078 = vsel %vm1077, %v1073, inf
        %1079 = vmin.xlane.f32.xlu0 %v1078
        %v1080 = vpop.xlane.xlu0 %1079
        %v1081 = vcvt.f32.s32 %v1080
        %v1082 = vcvt.f32.s32 %v1076
        %v1083 = vshll.u32 %v1082, 16
        %v1084 = vadd.s32 %v1083, %v1081
        %vm1085 = vcmp.eq.s32.totalorder %v1020, %v1039
        %vm1086 = vcmp.eq.s32.totalorder %v1021, %v1054
        %vm1087 = vcmp.eq.s32.totalorder %v1022, %v1069
        %vm1088 = vcmp.eq.s32.totalorder %v1023, %v1084
        %v1089 = vsel %vm1085, 1, 0
        %v1090 = vsel %vm1086, 1, 0
        %v1091 = vsel %vm1087, 1, 0
        %v1092 = vsel %vm1088, 1, 0
        %v1093 = vcvt.s32.f32 %v1089
        %v1094 = vcvt.s32.f32 %v1090
        %v1095 = vcvt.s32.f32 %v1091
        %v1096 = vcvt.s32.f32 %v1092
        %v1097 = vsel %vm1085, 2147483647, %v1020
        %v1098 = vsel %vm1086, 2147483647, %v1021
        %v1099 = vsel %vm1087, 2147483647, %v1022
        %v1100 = vsel %vm1088, 2147483647, %v1023
        %v1101 = vsel %vm1024, %v1097, 2147483647
        %v1102 = vand.u32 %v1101, 65535
        %v1103 = vshra.s32 %v1101, 16
        %v1104 = vcvt.s32.f32 %v1102
        %v1105 = vcvt.s32.f32 %v1103
        %1106 = vmin.xlane.f32.xlu0 %v1105
        %v1107 = vpop.xlane.xlu0 %1106
        %vm1108 = vcmp.eq.f32.partialorder %v1105, %v1107
        %v1109 = vsel %vm1108, %v1104, inf
        %1110 = vmin.xlane.f32.xlu0 %v1109
        %v1111 = vpop.xlane.xlu0 %1110
        %v1112 = vcvt.f32.s32 %v1111
        %v1113 = vcvt.f32.s32 %v1107
        %v1114 = vshll.u32 %v1113, 16
        %v1115 = vadd.s32 %v1114, %v1112
        %v1116 = vsel %vm1024, %v1098, 2147483647
        %v1117 = vand.u32 %v1116, 65535
        %v1118 = vshra.s32 %v1116, 16
        %v1119 = vcvt.s32.f32 %v1117
        %v1120 = vcvt.s32.f32 %v1118
        %1121 = vmin.xlane.f32.xlu0 %v1120
        %v1122 = vpop.xlane.xlu0 %1121
        %vm1123 = vcmp.eq.f32.partialorder %v1120, %v1122
        %v1124 = vsel %vm1123, %v1119, inf
        %1125 = vmin.xlane.f32.xlu0 %v1124
        %v1126 = vpop.xlane.xlu0 %1125
        %v1127 = vcvt.f32.s32 %v1126
        %v1128 = vcvt.f32.s32 %v1122
        %v1129 = vshll.u32 %v1128, 16
        %v1130 = vadd.s32 %v1129, %v1127
        %v1131 = vsel %vm1024, %v1099, 2147483647
        %v1132 = vand.u32 %v1131, 65535
        %v1133 = vshra.s32 %v1131, 16
        %v1134 = vcvt.s32.f32 %v1132
        %v1135 = vcvt.s32.f32 %v1133
        %1136 = vmin.xlane.f32.xlu0 %v1135
        %v1137 = vpop.xlane.xlu0 %1136
        %vm1138 = vcmp.eq.f32.partialorder %v1135, %v1137
        %v1139 = vsel %vm1138, %v1134, inf
        %1140 = vmin.xlane.f32.xlu0 %v1139
        %v1141 = vpop.xlane.xlu0 %1140
        %v1142 = vcvt.f32.s32 %v1141
        %v1143 = vcvt.f32.s32 %v1137
        %v1144 = vshll.u32 %v1143, 16
        %v1145 = vadd.s32 %v1144, %v1142
        %v1146 = vsel %vm1024, %v1100, 2147483647
        %v1147 = vand.u32 %v1146, 65535
        %v1148 = vshra.s32 %v1146, 16
        %v1149 = vcvt.s32.f32 %v1147
        %v1150 = vcvt.s32.f32 %v1148
        %1151 = vmin.xlane.f32.xlu0 %v1150
        %v1152 = vpop.xlane.xlu0 %1151
        %vm1153 = vcmp.eq.f32.partialorder %v1150, %v1152
        %v1154 = vsel %vm1153, %v1149, inf
        %1155 = vmin.xlane.f32.xlu0 %v1154
        %v1156 = vpop.xlane.xlu0 %1155
        %v1157 = vcvt.f32.s32 %v1156
        %v1158 = vcvt.f32.s32 %v1152
        %v1159 = vshll.u32 %v1158, 16
        %v1160 = vadd.s32 %v1159, %v1157
        %vm1161 = vcmp.eq.s32.totalorder %v1097, %v1115
        %vm1162 = vcmp.eq.s32.totalorder %v1098, %v1130
        %vm1163 = vcmp.eq.s32.totalorder %v1099, %v1145
        %vm1164 = vcmp.eq.s32.totalorder %v1100, %v1160
        %v1165 = vsel %vm1161, 1, 0
        %v1166 = vsel %vm1162, 1, 0
        %v1167 = vsel %vm1163, 1, 0
        %v1168 = vsel %vm1164, 1, 0
        %v1169 = vcvt.s32.f32 %v1165
        %v1170 = vcvt.s32.f32 %v1166
        %v1171 = vcvt.s32.f32 %v1167
        %v1172 = vcvt.s32.f32 %v1168
        %v1173 = vsel %vm1161, 2147483647, %v1097
        %v1174 = vsel %vm1162, 2147483647, %v1098
        %v1175 = vsel %vm1163, 2147483647, %v1099
        %v1176 = vsel %vm1164, 2147483647, %v1100
        %v1177 = vsel %vm1024, %v1173, 2147483647
        %v1178 = vand.u32 %v1177, 65535
        %v1179 = vshra.s32 %v1177, 16
        %v1180 = vcvt.s32.f32 %v1178
        %v1181 = vcvt.s32.f32 %v1179
        %1182 = vmin.xlane.f32.xlu0 %v1181
        %v1183 = vpop.xlane.xlu0 %1182
        %vm1184 = vcmp.eq.f32.partialorder %v1181, %v1183
        %v1185 = vsel %vm1184, %v1180, inf
        %1186 = vmin.xlane.f32.xlu0 %v1185
        %v1187 = vpop.xlane.xlu0 %1186
        %v1188 = vcvt.f32.s32 %v1187
        %v1189 = vcvt.f32.s32 %v1183
        %v1190 = vshll.u32 %v1189, 16
        %v1191 = vadd.s32 %v1190, %v1188
        %v1192 = vsel %vm1024, %v1174, 2147483647
        %v1193 = vand.u32 %v1192, 65535
        %v1194 = vshra.s32 %v1192, 16
        %v1195 = vcvt.s32.f32 %v1193
        %v1196 = vcvt.s32.f32 %v1194
        %1197 = vmin.xlane.f32.xlu0 %v1196
        %v1198 = vpop.xlane.xlu0 %1197
        %vm1199 = vcmp.eq.f32.partialorder %v1196, %v1198
        %v1200 = vsel %vm1199, %v1195, inf
        %1201 = vmin.xlane.f32.xlu0 %v1200
        %v1202 = vpop.xlane.xlu0 %1201
        %v1203 = vcvt.f32.s32 %v1202
        %v1204 = vcvt.f32.s32 %v1198
        %v1205 = vshll.u32 %v1204, 16
        %v1206 = vadd.s32 %v1205, %v1203
        %v1207 = vsel %vm1024, %v1175, 2147483647
        %v1208 = vand.u32 %v1207, 65535
        %v1209 = vshra.s32 %v1207, 16
        %v1210 = vcvt.s32.f32 %v1208
        %v1211 = vcvt.s32.f32 %v1209
        %1212 = vmin.xlane.f32.xlu0 %v1211
        %v1213 = vpop.xlane.xlu0 %1212
        %vm1214 = vcmp.eq.f32.partialorder %v1211, %v1213
        %v1215 = vsel %vm1214, %v1210, inf
        %1216 = vmin.xlane.f32.xlu0 %v1215
        %v1217 = vpop.xlane.xlu0 %1216
        %v1218 = vcvt.f32.s32 %v1217
        %v1219 = vcvt.f32.s32 %v1213
        %v1220 = vshll.u32 %v1219, 16
        %v1221 = vadd.s32 %v1220, %v1218
        %v1222 = vsel %vm1024, %v1176, 2147483647
        %v1223 = vand.u32 %v1222, 65535
        %v1224 = vshra.s32 %v1222, 16
        %v1225 = vcvt.s32.f32 %v1223
        %v1226 = vcvt.s32.f32 %v1224
        %1227 = vmin.xlane.f32.xlu0 %v1226
        %v1228 = vpop.xlane.xlu0 %1227
        %vm1229 = vcmp.eq.f32.partialorder %v1226, %v1228
        %v1230 = vsel %vm1229, %v1225, inf
        %1231 = vmin.xlane.f32.xlu0 %v1230
        %v1232 = vpop.xlane.xlu0 %1231
        %v1233 = vcvt.f32.s32 %v1232
        %v1234 = vcvt.f32.s32 %v1228
        %v1235 = vshll.u32 %v1234, 16
        %v1236 = vadd.s32 %v1235, %v1233
        %vm1237 = vcmp.eq.s32.totalorder %v1173, %v1191
        %vm1238 = vcmp.eq.s32.totalorder %v1174, %v1206
        %vm1239 = vcmp.eq.s32.totalorder %v1175, %v1221
        %vm1240 = vcmp.eq.s32.totalorder %v1176, %v1236
        %v1241 = vsel %vm1237, 1, 0
        %v1242 = vsel %vm1238, 1, 0
        %v1243 = vsel %vm1239, 1, 0
        %v1244 = vsel %vm1240, 1, 0
        %v1245 = vcvt.s32.f32 %v1241
        %v1246 = vcvt.s32.f32 %v1242
        %v1247 = vcvt.s32.f32 %v1243
        %v1248 = vcvt.s32.f32 %v1244
        %v1249 = vsel %vm1237, 2147483647, %v1173
        %v1250 = vsel %vm1238, 2147483647, %v1174
        %v1251 = vsel %vm1239, 2147483647, %v1175
        %v1252 = vsel %vm1240, 2147483647, %v1176
        %v1253 = vsel %vm1024, %v1249, 2147483647
        %v1254 = vand.u32 %v1253, 65535
        %v1255 = vshra.s32 %v1253, 16
        %v1256 = vcvt.s32.f32 %v1254
        %v1257 = vcvt.s32.f32 %v1255
        %1258 = vmin.xlane.f32.xlu0 %v1257
        %v1259 = vpop.xlane.xlu0 %1258
        %vm1260 = vcmp.eq.f32.partialorder %v1257, %v1259
        %v1261 = vsel %vm1260, %v1256, inf
        %1262 = vmin.xlane.f32.xlu0 %v1261
        %v1263 = vpop.xlane.xlu0 %1262
        %v1264 = vcvt.f32.s32 %v1263
        %v1265 = vcvt.f32.s32 %v1259
        %v1266 = vshll.u32 %v1265, 16
        %v1267 = vadd.s32 %v1266, %v1264
        %v1268 = vsel %vm1024, %v1250, 2147483647
        %v1269 = vand.u32 %v1268, 65535
        %v1270 = vshra.s32 %v1268, 16
        %v1271 = vcvt.s32.f32 %v1269
        %v1272 = vcvt.s32.f32 %v1270
        %1273 = vmin.xlane.f32.xlu0 %v1272
        %v1274 = vpop.xlane.xlu0 %1273
        %vm1275 = vcmp.eq.f32.partialorder %v1272, %v1274
        %v1276 = vsel %vm1275, %v1271, inf
        %1277 = vmin.xlane.f32.xlu0 %v1276
        %v1278 = vpop.xlane.xlu0 %1277
        %v1279 = vcvt.f32.s32 %v1278
        %v1280 = vcvt.f32.s32 %v1274
        %v1281 = vshll.u32 %v1280, 16
        %v1282 = vadd.s32 %v1281, %v1279
        %v1283 = vsel %vm1024, %v1251, 2147483647
        %v1284 = vand.u32 %v1283, 65535
        %v1285 = vshra.s32 %v1283, 16
        %v1286 = vcvt.s32.f32 %v1284
        %v1287 = vcvt.s32.f32 %v1285
        %1288 = vmin.xlane.f32.xlu0 %v1287
        %v1289 = vpop.xlane.xlu0 %1288
        %vm1290 = vcmp.eq.f32.partialorder %v1287, %v1289
        %v1291 = vsel %vm1290, %v1286, inf
        %1292 = vmin.xlane.f32.xlu0 %v1291
        %v1293 = vpop.xlane.xlu0 %1292
        %v1294 = vcvt.f32.s32 %v1293
        %v1295 = vcvt.f32.s32 %v1289
        %v1296 = vshll.u32 %v1295, 16
        %v1297 = vadd.s32 %v1296, %v1294
        %v1298 = vsel %vm1024, %v1252, 2147483647
        %v1299 = vand.u32 %v1298, 65535
        %v1300 = vshra.s32 %v1298, 16
        %v1301 = vcvt.s32.f32 %v1299
        %v1302 = vcvt.s32.f32 %v1300
        %1303 = vmin.xlane.f32.xlu0 %v1302
        %v1304 = vpop.xlane.xlu0 %1303
        %vm1305 = vcmp.eq.f32.partialorder %v1302, %v1304
        %v1306 = vsel %vm1305, %v1301, inf
        %1307 = vmin.xlane.f32.xlu0 %v1306
        %v1308 = vpop.xlane.xlu0 %1307
        %v1309 = vcvt.f32.s32 %v1308
        %v1310 = vcvt.f32.s32 %v1304
        %v1311 = vshll.u32 %v1310, 16
        %v1312 = vadd.s32 %v1311, %v1309
        %vm1313 = vcmp.eq.s32.totalorder %v1249, %v1267
        %vm1314 = vcmp.eq.s32.totalorder %v1250, %v1282
        %vm1315 = vcmp.eq.s32.totalorder %v1251, %v1297
        %vm1316 = vcmp.eq.s32.totalorder %v1252, %v1312
        %v1317 = vsel %vm1313, 1, 0
        %v1318 = vsel %vm1314, 1, 0
        %v1319 = vsel %vm1315, 1, 0
        %v1320 = vsel %vm1316, 1, 0
        %v1321 = vcvt.s32.f32 %v1317
        %v1322 = vcvt.s32.f32 %v1318
        %v1323 = vcvt.s32.f32 %v1319
        %v1324 = vcvt.s32.f32 %v1320
        %v1326 = vsel %vm1024, %v1093, 0
        %v1329 = vsel %vm1024, %v1094, 0
        %v1332 = vsel %vm1024, %v1095, 0
        %v1335 = vsel %vm1024, %v1096, 0
        %v1338 = vsel %vm1024, %v1169, 0
        %v1341 = vsel %vm1024, %v1170, 0
        %v1344 = vsel %vm1024, %v1171, 0
        %v1347 = vsel %vm1024, %v1172, 0
        %v1350 = vsel %vm1024, %v1245, 0
        %v1353 = vsel %vm1024, %v1246, 0
        %v1356 = vsel %vm1024, %v1247, 0
        %v1359 = vsel %vm1024, %v1248, 0
        %v1362 = vsel %vm1024, %v1321, 0
        %v1365 = vsel %vm1024, %v1322, 0
        %v1368 = vsel %vm1024, %v1323, 0
        %v1371 = vsel %vm1024, %v1324, 0
        %1373 = vmatprep.subr.mxu0 0.0
        %1374 = vmatpush1.msra.mxu0 0.0
        %1375 = vmatprep.subr.mxu0 0.0
        %1376 = vmatpush1.msra.mxu0 0.0
        %1377 = vmatprep.subr.mxu0 0.0
        %1378 = vmatpush1.msra.mxu0 0.0
        %1379 = vmatprep.subr.mxu0 0.0
        %1380 = vmatpush1.msra.mxu0 0.0
        %1381 = vmatprep.subr.mxu0 0.0
        %1382 = vmatpush1.msra.mxu0 0.0
        %1383 = vmatprep.subr.mxu0 0.0
        %1384 = vmatpush1.msra.mxu0 0.0
        %1385 = vmatprep.subr.mxu0 0.0
        %1386 = vmatpush1.msra.mxu0 0.0
        %1387 = vmatprep.subr.mxu0 0.0
        %1388 = vmatpush1.msra.mxu0 0.0
        %1389 = vmatprep.subr.mxu0 0.0
        %1390 = vmatpush1.msra.mxu0 %v917
        %1391 = vmatprep.subr.mxu0 0.0
        %1392 = vmatpush1.msra.mxu0 %v916
        %1393 = vmatprep.subr.mxu0 0.0
        %1394 = vmatpush1.msra.mxu0 %v915
        %1395 = vmatprep.subr.mxu0 0.0
        %1396 = vmatpush1.msra.mxu0 %v914
        %1397 = vmatprep.subr.mxu0 0.0
        %1398 = vmatpush1.msra.mxu0 %v913
        %1399 = vmatprep.subr.mxu0 0.0
        %1400 = vmatpush1.msra.mxu0 %v912
        %1401 = vmatprep.subr.mxu0 0.0
        %1402 = vmatpush1.msra.mxu0 %v911
        %1403 = vmatprep.subr.mxu0 0.0
        %1404 = vmatpush1.msra.mxu0 %v910
        %1405 = vmatprep.subr.mxu0 0.0
        %1406 = vmatpush2.msra.mxu0 0.0
        %1407 = vmatprep.subr.mxu0 0.0
        %1408 = vmatpush2.msra.mxu0 0.0
        %1409 = vmatprep.subr.mxu0 0.0
        %1410 = vmatpush2.msra.mxu0 0.0
        %1411 = vmatprep.subr.mxu0 0.0
        %1412 = vmatpush2.msra.mxu0 0.0
        %1413 = vmatprep.subr.mxu0 0.0
        %1414 = vmatpush2.msra.mxu0 0.0
        %1415 = vmatprep.subr.mxu0 0.0
        %1416 = vmatpush2.msra.mxu0 0.0
        %1417 = vmatprep.subr.mxu0 0.0
        %1418 = vmatpush2.msra.mxu0 0.0
        %1419 = vmatprep.subr.mxu0 0.0
        %1420 = vmatpush2.msra.mxu0 0.0
        %1421 = vmatprep.subr.mxu0 0.0
        %1422 = vmatpush2.msra.mxu0 0.0
        %1423 = vmatprep.subr.mxu0 0.0
        %1424 = vmatpush2.msra.mxu0 0.0
        %1425 = vmatprep.subr.mxu0 0.0
        %1426 = vmatpush2.msra.mxu0 0.0
        %1427 = vmatprep.subr.mxu0 0.0
        %1428 = vmatpush2.msra.mxu0 0.0
        %1429 = vmatprep.subr.mxu0 0.0
        %1430 = vmatpush2.msra.mxu0 0.0
        %1431 = vmatprep.subr.mxu0 0.0
        %1432 = vmatpush2.msra.mxu0 0.0
        %1433 = vmatprep.subr.mxu0 0.0
        %1434 = vmatpush2.msra.mxu0 0.0
        %1435 = vmatprep.subr.mxu0 0.0
        %1436 = vmatpush2.msra.mxu0 0.0
        %1437 = vmatprep.mubr.f32.mxu0 0.0
        %1438 = vmatmul.mubr.f32.gmra.mxu0 %v1326
        %v1439 = vpop.f32.mrf.mxu0
        %v1440 = vadd.f32 0.0, %v1439
        %v1441 = vpop.f32.mrf.mxu0
        %1442 = vmatprep.mubr.f32.mxu0 0.0
        %1443 = vmatmul.mubr.f32.gmra.mxu0 %v1329
        %v1444 = vpop.f32.mrf.mxu0
        %v1445 = vadd.f32 0.0, %v1444
        %v1446 = vpop.f32.mrf.mxu0
        %1447 = vmatprep.mubr.f32.mxu0 0.0
        %1448 = vmatmul.mubr.f32.gmra.mxu0 %v1332
        %v1449 = vpop.f32.mrf.mxu0
        %v1450 = vadd.f32 0.0, %v1449
        %v1451 = vpop.f32.mrf.mxu0
        %1452 = vmatprep.mubr.f32.mxu0 0.0
        %1453 = vmatmul.mubr.f32.gmra.mxu0 %v1335
        %v1454 = vpop.f32.mrf.mxu0
        %v1455 = vadd.f32 0.0, %v1454
        %v1456 = vpop.f32.mrf.mxu0
        %1457 = vmatprep.mubr.f32.mxu0 0.0
        %1458 = vmatmul.mubr.f32.gmra.mxu0 %v1338
        %v1459 = vpop.f32.mrf.mxu0
        %v1460 = vadd.f32 0.0, %v1459
        %v1461 = vpop.f32.mrf.mxu0
        %1462 = vmatprep.mubr.f32.mxu0 0.0
        %1463 = vmatmul.mubr.f32.gmra.mxu0 %v1341
        %v1464 = vpop.f32.mrf.mxu0
        %v1465 = vadd.f32 0.0, %v1464
        %v1466 = vpop.f32.mrf.mxu0
        %1467 = vmatprep.mubr.f32.mxu0 0.0
        %1468 = vmatmul.mubr.f32.gmra.mxu0 %v1344
        %v1469 = vpop.f32.mrf.mxu0
        %v1470 = vadd.f32 0.0, %v1469
        %v1471 = vpop.f32.mrf.mxu0
        %1472 = vmatprep.mubr.f32.mxu0 0.0
        %1473 = vmatmul.mubr.f32.gmra.mxu0 %v1347
        %v1474 = vpop.f32.mrf.mxu0
        %v1475 = vadd.f32 0.0, %v1474
        %v1476 = vpop.f32.mrf.mxu0
        %1477 = vmatprep.mubr.f32.mxu0 0.0
        %1478 = vmatmul.mubr.f32.gmra.mxu0 %v1350
        %v1479 = vpop.f32.mrf.mxu0
        %v1480 = vadd.f32 0.0, %v1479
        %v1481 = vpop.f32.mrf.mxu0
        %1482 = vmatprep.mubr.f32.mxu0 0.0
        %1483 = vmatmul.mubr.f32.gmra.mxu0 %v1353
        %v1484 = vpop.f32.mrf.mxu0
        %v1485 = vadd.f32 0.0, %v1484
        %v1486 = vpop.f32.mrf.mxu0
        %1487 = vmatprep.mubr.f32.mxu0 0.0
        %1488 = vmatmul.mubr.f32.gmra.mxu0 %v1356
        %v1489 = vpop.f32.mrf.mxu0
        %v1490 = vadd.f32 0.0, %v1489
        %v1491 = vpop.f32.mrf.mxu0
        %1492 = vmatprep.mubr.f32.mxu0 0.0
        %1493 = vmatmul.mubr.f32.gmra.mxu0 %v1359
        %v1494 = vpop.f32.mrf.mxu0
        %v1495 = vadd.f32 0.0, %v1494
        %v1496 = vpop.f32.mrf.mxu0
        %1497 = vmatprep.mubr.f32.mxu0 0.0
        %1498 = vmatmul.mubr.f32.gmra.mxu0 %v1362
        %v1499 = vpop.f32.mrf.mxu0
        %v1500 = vadd.f32 0.0, %v1499
        %v1501 = vpop.f32.mrf.mxu0
        %1502 = vmatprep.mubr.f32.mxu0 0.0
        %1503 = vmatmul.mubr.f32.gmra.mxu0 %v1365
        %v1504 = vpop.f32.mrf.mxu0
        %v1505 = vadd.f32 0.0, %v1504
        %v1506 = vpop.f32.mrf.mxu0
        %1507 = vmatprep.mubr.f32.mxu0 0.0
        %1508 = vmatmul.mubr.f32.gmra.mxu0 %v1368
        %v1509 = vpop.f32.mrf.mxu0
        %v1510 = vadd.f32 0.0, %v1509
        %v1511 = vpop.f32.mrf.mxu0
        %1512 = vmatprep.mubr.f32.mxu0 0.0
        %1513 = vmatmul.mubr.f32.gmra.mxu0 %v1371
        %v1514 = vpop.f32.mrf.mxu0
        %v1515 = vadd.f32 0.0, %v1514
        %v1516 = vpop.f32.mrf.mxu0
        %1517 = vdwg.mxu0
        %1518 = vmatprep.subr.mxu0 0.0
        %1519 = vmatpush1.msra.mxu0 0.0
        %1520 = vmatprep.subr.mxu0 0.0
        %1521 = vmatpush1.msra.mxu0 0.0
        %1522 = vmatprep.subr.mxu0 0.0
        %1523 = vmatpush1.msra.mxu0 0.0
        %1524 = vmatprep.subr.mxu0 0.0
        %1525 = vmatpush1.msra.mxu0 0.0
        %1526 = vmatprep.subr.mxu0 0.0
        %1527 = vmatpush1.msra.mxu0 0.0
        %1528 = vmatprep.subr.mxu0 0.0
        %1529 = vmatpush1.msra.mxu0 0.0
        %1530 = vmatprep.subr.mxu0 0.0
        %1531 = vmatpush1.msra.mxu0 0.0
        %1532 = vmatprep.subr.mxu0 0.0
        %1533 = vmatpush1.msra.mxu0 0.0
        %1534 = vmatprep.subr.mxu0 0.0
        %1535 = vmatpush1.msra.mxu0 %v397
        %1536 = vmatprep.subr.mxu0 0.0
        %1537 = vmatpush1.msra.mxu0 %v396
        %1538 = vmatprep.subr.mxu0 0.0
        %1539 = vmatpush1.msra.mxu0 %v395
        %1540 = vmatprep.subr.mxu0 0.0
        %1541 = vmatpush1.msra.mxu0 %v394
        %1542 = vmatprep.subr.mxu0 0.0
        %1543 = vmatpush1.msra.mxu0 %v393
        %1544 = vmatprep.subr.mxu0 0.0
        %1545 = vmatpush1.msra.mxu0 %v392
        %1546 = vmatprep.subr.mxu0 0.0
        %1547 = vmatpush1.msra.mxu0 %v391
        %1548 = vmatprep.subr.mxu0 0.0
        %1549 = vmatpush1.msra.mxu0 %v390
        %1550 = vmatprep.subr.mxu0 0.0
        %1551 = vmatpush2.msra.mxu0 0.0
        %1552 = vmatprep.subr.mxu0 0.0
        %1553 = vmatpush2.msra.mxu0 0.0
        %1554 = vmatprep.subr.mxu0 0.0
        %1555 = vmatpush2.msra.mxu0 0.0
        %1556 = vmatprep.subr.mxu0 0.0
        %1557 = vmatpush2.msra.mxu0 0.0
        %1558 = vmatprep.subr.mxu0 0.0
        %1559 = vmatpush2.msra.mxu0 0.0
        %1560 = vmatprep.subr.mxu0 0.0
        %1561 = vmatpush2.msra.mxu0 0.0
        %1562 = vmatprep.subr.mxu0 0.0
        %1563 = vmatpush2.msra.mxu0 0.0
        %1564 = vmatprep.subr.mxu0 0.0
        %1565 = vmatpush2.msra.mxu0 0.0
        %1566 = vmatprep.subr.mxu0 0.0
        %1567 = vmatpush2.msra.mxu0 0.0
        %1568 = vmatprep.subr.mxu0 0.0
        %1569 = vmatpush2.msra.mxu0 0.0
        %1570 = vmatprep.subr.mxu0 0.0
        %1571 = vmatpush2.msra.mxu0 0.0
        %1572 = vmatprep.subr.mxu0 0.0
        %1573 = vmatpush2.msra.mxu0 0.0
        %1574 = vmatprep.subr.mxu0 0.0
        %1575 = vmatpush2.msra.mxu0 0.0
        %1576 = vmatprep.subr.mxu0 0.0
        %1577 = vmatpush2.msra.mxu0 0.0
        %1578 = vmatprep.subr.mxu0 0.0
        %1579 = vmatpush2.msra.mxu0 0.0
        %1580 = vmatprep.subr.mxu0 0.0
        %1581 = vmatpush2.msra.mxu0 0.0
        %1582 = vmatprep.mubr.f32.mxu0 0.0
        %1583 = vmatmul.mubr.f32.gmra.mxu0 %v1326
        %v1584 = vpop.f32.mrf.mxu0
        %v1585 = vadd.f32 0.0, %v1584
        %v1586 = vpop.f32.mrf.mxu0
        %1587 = vmatprep.mubr.f32.mxu0 0.0
        %1588 = vmatmul.mubr.f32.gmra.mxu0 %v1329
        %v1589 = vpop.f32.mrf.mxu0
        %v1590 = vadd.f32 0.0, %v1589
        %v1591 = vpop.f32.mrf.mxu0
        %1592 = vmatprep.mubr.f32.mxu0 0.0
        %1593 = vmatmul.mubr.f32.gmra.mxu0 %v1332
        %v1594 = vpop.f32.mrf.mxu0
        %v1595 = vadd.f32 0.0, %v1594
        %v1596 = vpop.f32.mrf.mxu0
        %1597 = vmatprep.mubr.f32.mxu0 0.0
        %1598 = vmatmul.mubr.f32.gmra.mxu0 %v1335
        %v1599 = vpop.f32.mrf.mxu0
        %v1600 = vadd.f32 0.0, %v1599
        %v1601 = vpop.f32.mrf.mxu0
        %1602 = vmatprep.mubr.f32.mxu0 0.0
        %1603 = vmatmul.mubr.f32.gmra.mxu0 %v1338
        %v1604 = vpop.f32.mrf.mxu0
        %v1605 = vadd.f32 0.0, %v1604
        %v1606 = vpop.f32.mrf.mxu0
        %1607 = vmatprep.mubr.f32.mxu0 0.0
        %1608 = vmatmul.mubr.f32.gmra.mxu0 %v1341
        %v1609 = vpop.f32.mrf.mxu0
        %v1610 = vadd.f32 0.0, %v1609
        %v1611 = vpop.f32.mrf.mxu0
        %1612 = vmatprep.mubr.f32.mxu0 0.0
        %1613 = vmatmul.mubr.f32.gmra.mxu0 %v1344
        %v1614 = vpop.f32.mrf.mxu0
        %v1615 = vadd.f32 0.0, %v1614
        %v1616 = vpop.f32.mrf.mxu0
        %1617 = vmatprep.mubr.f32.mxu0 0.0
        %1618 = vmatmul.mubr.f32.gmra.mxu0 %v1347
        %v1619 = vpop.f32.mrf.mxu0
        %v1620 = vadd.f32 0.0, %v1619
        %v1621 = vpop.f32.mrf.mxu0
        %1622 = vmatprep.mubr.f32.mxu0 0.0
        %1623 = vmatmul.mubr.f32.gmra.mxu0 %v1350
        %v1624 = vpop.f32.mrf.mxu0
        %v1625 = vadd.f32 0.0, %v1624
        %v1626 = vpop.f32.mrf.mxu0
        %1627 = vmatprep.mubr.f32.mxu0 0.0
        %1628 = vmatmul.mubr.f32.gmra.mxu0 %v1353
        %v1629 = vpop.f32.mrf.mxu0
        %v1630 = vadd.f32 0.0, %v1629
        %v1631 = vpop.f32.mrf.mxu0
        %1632 = vmatprep.mubr.f32.mxu0 0.0
        %1633 = vmatmul.mubr.f32.gmra.mxu0 %v1356
        %v1634 = vpop.f32.mrf.mxu0
        %v1635 = vadd.f32 0.0, %v1634
        %v1636 = vpop.f32.mrf.mxu0
        %1637 = vmatprep.mubr.f32.mxu0 0.0
        %1638 = vmatmul.mubr.f32.gmra.mxu0 %v1359
        %v1639 = vpop.f32.mrf.mxu0
        %v1640 = vadd.f32 0.0, %v1639
        %v1641 = vpop.f32.mrf.mxu0
        %1642 = vmatprep.mubr.f32.mxu0 0.0
        %1643 = vmatmul.mubr.f32.gmra.mxu0 %v1362
        %v1644 = vpop.f32.mrf.mxu0
        %v1645 = vadd.f32 0.0, %v1644
        %v1646 = vpop.f32.mrf.mxu0
        %1647 = vmatprep.mubr.f32.mxu0 0.0
        %1648 = vmatmul.mubr.f32.gmra.mxu0 %v1365
        %v1649 = vpop.f32.mrf.mxu0
        %v1650 = vadd.f32 0.0, %v1649
        %v1651 = vpop.f32.mrf.mxu0
        %1652 = vmatprep.mubr.f32.mxu0 0.0
        %1653 = vmatmul.mubr.f32.gmra.mxu0 %v1368
        %v1654 = vpop.f32.mrf.mxu0
        %v1655 = vadd.f32 0.0, %v1654
        %v1656 = vpop.f32.mrf.mxu0
        %1657 = vmatprep.mubr.f32.mxu0 0.0
        %1658 = vmatmul.mubr.f32.gmra.mxu0 %v1371
        %v1659 = vpop.f32.mrf.mxu0
        %v1660 = vadd.f32 0.0, %v1659
        %v1661 = vpop.f32.mrf.mxu0
        %1662 = vdwg.mxu0
        %v1663 = vmul.f32 %v624, %v1440
        %v1664 = vmul.f32 %v625, %v1445
        %v1665 = vmul.f32 %v626, %v1450
        %v1666 = vmul.f32 %v627, %v1455
        %v1667 = vsel %vm526, %v1663, -inf
        %1668 = vmax.xlane.f32.xlu0 %v1667
        %v1669 = vpop.xlane.xlu0 %1668
        %v1670 = vsel %vm526, %v1664, -inf
        %1671 = vmax.xlane.f32.xlu0 %v1670
        %v1672 = vpop.xlane.xlu0 %1671
        %v1673 = vsel %vm526, %v1665, -inf
        %1674 = vmax.xlane.f32.xlu0 %v1673
        %v1675 = vpop.xlane.xlu0 %1674
        %v1676 = vsel %vm526, %v1666, -inf
        %1677 = vmax.xlane.f32.xlu0 %v1676
        %v1678 = vpop.xlane.xlu0 %1677
        %v1679 = vsub.f32 %v1663, %v1669
        %v1680 = vsub.f32 %v1664, %v1672
        %v1681 = vsub.f32 %v1665, %v1675
        %v1682 = vsub.f32 %v1666, %v1678
        %v1683 = vmul.f32 %v1679, 1.442695
        %v1684 = vpow.pop %v1683
        %v1685 = vmul.f32 %v1680, 1.442695
        %v1686 = vpow.pop %v1685
        %v1687 = vmul.f32 %v1681, 1.442695
        %v1688 = vpow.pop %v1687
        %v1689 = vmul.f32 %v1682, 1.442695
        %v1690 = vpow.pop %v1689
        %v1691 = vsel %vm526, %v1684, 0.0
        %1692 = vadd.xlane.f32.xlu0 %v1691
        %v1693 = vpop.xlane.xlu0 %1692
        %v1694 = vsel %vm526, %v1686, 0.0
        %1695 = vadd.xlane.f32.xlu0 %v1694
        %v1696 = vpop.xlane.xlu0 %1695
        %v1697 = vsel %vm526, %v1688, 0.0
        %1698 = vadd.xlane.f32.xlu0 %v1697
        %v1699 = vpop.xlane.xlu0 %1698
        %v1700 = vsel %vm526, %v1690, 0.0
        %1701 = vadd.xlane.f32.xlu0 %v1700
        %v1702 = vpop.xlane.xlu0 %1701
        %v1703 = vrcp.pop %v1693
        %v1704 = vrcp.pop %v1696
        %v1705 = vrcp.pop %v1699
        %v1706 = vrcp.pop %v1702
        %v1707 = vmul.f32 %v1684, %v1703
        %v1708 = vmul.f32 %v1686, %v1704
        %v1709 = vmul.f32 %v1688, %v1705
        %v1710 = vmul.f32 %v1690, %v1706
        %v1711 = vmul.f32 %v1707, %v1585
        %v1712 = vmul.f32 %v1708, %v1590
        %v1713 = vmul.f32 %v1709, %v1595
        %v1714 = vmul.f32 %v1710, %v1600
        %v1715 = vmul.f32 %v624, %v1460
        %v1716 = vmul.f32 %v625, %v1465
        %v1717 = vmul.f32 %v626, %v1470
        %v1718 = vmul.f32 %v627, %v1475
        %v1719 = vsel %vm526, %v1715, -inf
        %1720 = vmax.xlane.f32.xlu0 %v1719
        %v1721 = vpop.xlane.xlu0 %1720
        %v1722 = vsel %vm526, %v1716, -inf
        %1723 = vmax.xlane.f32.xlu0 %v1722
        %v1724 = vpop.xlane.xlu0 %1723
        %v1725 = vsel %vm526, %v1717, -inf
        %1726 = vmax.xlane.f32.xlu0 %v1725
        %v1727 = vpop.xlane.xlu0 %1726
        %v1728 = vsel %vm526, %v1718, -inf
        %1729 = vmax.xlane.f32.xlu0 %v1728
        %v1730 = vpop.xlane.xlu0 %1729
        %v1731 = vsub.f32 %v1715, %v1721
        %v1732 = vsub.f32 %v1716, %v1724
        %v1733 = vsub.f32 %v1717, %v1727
        %v1734 = vsub.f32 %v1718, %v1730
        %v1735 = vmul.f32 %v1731, 1.442695
        %v1736 = vpow.pop %v1735
        %v1737 = vmul.f32 %v1732, 1.442695
        %v1738 = vpow.pop %v1737
        %v1739 = vmul.f32 %v1733, 1.442695
        %v1740 = vpow.pop %v1739
        %v1741 = vmul.f32 %v1734, 1.442695
        %v1742 = vpow.pop %v1741
        %v1743 = vsel %vm526, %v1736, 0.0
        %1744 = vadd.xlane.f32.xlu0 %v1743
        %v1745 = vpop.xlane.xlu0 %1744
        %v1746 = vsel %vm526, %v1738, 0.0
        %1747 = vadd.xlane.f32.xlu0 %v1746
        %v1748 = vpop.xlane.xlu0 %1747
        %v1749 = vsel %vm526, %v1740, 0.0
        %1750 = vadd.xlane.f32.xlu0 %v1749
        %v1751 = vpop.xlane.xlu0 %1750
        %v1752 = vsel %vm526, %v1742, 0.0
        %1753 = vadd.xlane.f32.xlu0 %v1752
        %v1754 = vpop.xlane.xlu0 %1753
        %v1755 = vrcp.pop %v1745
        %v1756 = vrcp.pop %v1748
        %v1757 = vrcp.pop %v1751
        %v1758 = vrcp.pop %v1754
        %v1759 = vmul.f32 %v1736, %v1755
        %v1760 = vmul.f32 %v1738, %v1756
        %v1761 = vmul.f32 %v1740, %v1757
        %v1762 = vmul.f32 %v1742, %v1758
        %v1763 = vmul.f32 %v1759, %v1605
        %v1764 = vmul.f32 %v1760, %v1610
        %v1765 = vmul.f32 %v1761, %v1615
        %v1766 = vmul.f32 %v1762, %v1620
        %v1767 = vmul.f32 %v624, %v1480
        %v1768 = vmul.f32 %v625, %v1485
        %v1769 = vmul.f32 %v626, %v1490
        %v1770 = vmul.f32 %v627, %v1495
        %v1771 = vsel %vm526, %v1767, -inf
        %1772 = vmax.xlane.f32.xlu0 %v1771
        %v1773 = vpop.xlane.xlu0 %1772
        %v1774 = vsel %vm526, %v1768, -inf
        %1775 = vmax.xlane.f32.xlu0 %v1774
        %v1776 = vpop.xlane.xlu0 %1775
        %v1777 = vsel %vm526, %v1769, -inf
        %1778 = vmax.xlane.f32.xlu0 %v1777
        %v1779 = vpop.xlane.xlu0 %1778
        %v1780 = vsel %vm526, %v1770, -inf
        %1781 = vmax.xlane.f32.xlu0 %v1780
        %v1782 = vpop.xlane.xlu0 %1781
        %v1783 = vsub.f32 %v1767, %v1773
        %v1784 = vsub.f32 %v1768, %v1776
        %v1785 = vsub.f32 %v1769, %v1779
        %v1786 = vsub.f32 %v1770, %v1782
        %v1787 = vmul.f32 %v1783, 1.442695
        %v1788 = vpow.pop %v1787
        %v1789 = vmul.f32 %v1784, 1.442695
        %v1790 = vpow.pop %v1789
        %v1791 = vmul.f32 %v1785, 1.442695
        %v1792 = vpow.pop %v1791
        %v1793 = vmul.f32 %v1786, 1.442695
        %v1794 = vpow.pop %v1793
        %v1795 = vsel %vm526, %v1788, 0.0
        %1796 = vadd.xlane.f32.xlu0 %v1795
        %v1797 = vpop.xlane.xlu0 %1796
        %v1798 = vsel %vm526, %v1790, 0.0
        %1799 = vadd.xlane.f32.xlu0 %v1798
        %v1800 = vpop.xlane.xlu0 %1799
        %v1801 = vsel %vm526, %v1792, 0.0
        %1802 = vadd.xlane.f32.xlu0 %v1801
        %v1803 = vpop.xlane.xlu0 %1802
        %v1804 = vsel %vm526, %v1794, 0.0
        %1805 = vadd.xlane.f32.xlu0 %v1804
        %v1806 = vpop.xlane.xlu0 %1805
        %v1807 = vrcp.pop %v1797
        %v1808 = vrcp.pop %v1800
        %v1809 = vrcp.pop %v1803
        %v1810 = vrcp.pop %v1806
        %v1811 = vmul.f32 %v1788, %v1807
        %v1812 = vmul.f32 %v1790, %v1808
        %v1813 = vmul.f32 %v1792, %v1809
        %v1814 = vmul.f32 %v1794, %v1810
        %v1815 = vmul.f32 %v1811, %v1625
        %v1816 = vmul.f32 %v1812, %v1630
        %v1817 = vmul.f32 %v1813, %v1635
        %v1818 = vmul.f32 %v1814, %v1640
        %v1819 = vmul.f32 %v624, %v1500
        %v1820 = vmul.f32 %v625, %v1505
        %v1821 = vmul.f32 %v626, %v1510
        %v1822 = vmul.f32 %v627, %v1515
        %v1823 = vsel %vm526, %v1819, -inf
        %1824 = vmax.xlane.f32.xlu0 %v1823
        %v1825 = vpop.xlane.xlu0 %1824
        %v1826 = vsel %vm526, %v1820, -inf
        %1827 = vmax.xlane.f32.xlu0 %v1826
        %v1828 = vpop.xlane.xlu0 %1827
        %v1829 = vsel %vm526, %v1821, -inf
        %1830 = vmax.xlane.f32.xlu0 %v1829
        %v1831 = vpop.xlane.xlu0 %1830
        %v1832 = vsel %vm526, %v1822, -inf
        %1833 = vmax.xlane.f32.xlu0 %v1832
        %v1834 = vpop.xlane.xlu0 %1833
        %v1835 = vsub.f32 %v1819, %v1825
        %v1836 = vsub.f32 %v1820, %v1828
        %v1837 = vsub.f32 %v1821, %v1831
        %v1838 = vsub.f32 %v1822, %v1834
        %v1839 = vmul.f32 %v1835, 1.442695
        %v1840 = vpow.pop %v1839
        %v1841 = vmul.f32 %v1836, 1.442695
        %v1842 = vpow.pop %v1841
        %v1843 = vmul.f32 %v1837, 1.442695
        %v1844 = vpow.pop %v1843
        %v1845 = vmul.f32 %v1838, 1.442695
        %v1846 = vpow.pop %v1845
        %v1847 = vsel %vm526, %v1840, 0.0
        %1848 = vadd.xlane.f32.xlu0 %v1847
        %v1849 = vpop.xlane.xlu0 %1848
        %v1850 = vsel %vm526, %v1842, 0.0
        %1851 = vadd.xlane.f32.xlu0 %v1850
        %v1852 = vpop.xlane.xlu0 %1851
        %v1853 = vsel %vm526, %v1844, 0.0
        %1854 = vadd.xlane.f32.xlu0 %v1853
        %v1855 = vpop.xlane.xlu0 %1854
        %v1856 = vsel %vm526, %v1846, 0.0
        %1857 = vadd.xlane.f32.xlu0 %v1856
        %v1858 = vpop.xlane.xlu0 %1857
        %v1859 = vrcp.pop %v1849
        %v1860 = vrcp.pop %v1852
        %v1861 = vrcp.pop %v1855
        %v1862 = vrcp.pop %v1858
        %v1863 = vmul.f32 %v1840, %v1859
        %v1864 = vmul.f32 %v1842, %v1860
        %v1865 = vmul.f32 %v1844, %v1861
        %v1866 = vmul.f32 %v1846, %v1862
        %v1867 = vmul.f32 %v1863, %v1645
        %v1868 = vmul.f32 %v1864, %v1650
        %v1869 = vmul.f32 %v1865, %v1655
        %v1870 = vmul.f32 %v1866, %v1660
        %1875 = vrot.lane.b32.xlu0 %v1763, 32
        %v1876 = vpop.permute.xlu0 %1875
        %1877 = vrot.lane.b32.xlu0 %v1764, 32
        %v1878 = vpop.permute.xlu0 %1877
        %1879 = vrot.lane.b32.xlu0 %v1765, 32
        %v1880 = vpop.permute.xlu0 %1879
        %1881 = vrot.lane.b32.xlu0 %v1766, 32
        %v1882 = vpop.permute.xlu0 %1881
        %1891 = vrot.lane.b32.xlu0 %v1815, 64
        %v1892 = vpop.permute.xlu0 %1891
        %1893 = vrot.lane.b32.xlu0 %v1816, 64
        %v1894 = vpop.permute.xlu0 %1893
        %1895 = vrot.lane.b32.xlu0 %v1817, 64
        %v1896 = vpop.permute.xlu0 %1895
        %1897 = vrot.lane.b32.xlu0 %v1818, 64
        %v1898 = vpop.permute.xlu0 %1897
        %1907 = vrot.lane.b32.xlu0 %v1867, 96
        %v1908 = vpop.permute.xlu0 %1907
        %1909 = vrot.lane.b32.xlu0 %v1868, 96
        %v1910 = vpop.permute.xlu0 %1909
        %1911 = vrot.lane.b32.xlu0 %v1869, 96
        %v1912 = vpop.permute.xlu0 %1911
        %1913 = vrot.lane.b32.xlu0 %v1870, 96
        %v1914 = vpop.permute.xlu0 %1913
        %v1919 = vsel %vm526, %v1711, %v1876
        %v1920 = vsel %vm526, %v1712, %v1878
        %v1921 = vsel %vm526, %v1713, %v1880
        %v1922 = vsel %vm526, %v1714, %v1882
        %v1923 = vsel %vm1024, %v1919, %v1892
        %v1924 = vsel %vm1024, %v1920, %v1894
        %v1925 = vsel %vm1024, %v1921, %v1896
        %v1926 = vsel %vm1024, %v1922, %v1898
        %vm1927 = vcmask 785408
        %v1928 = vsel %vm1927, %v1923, %v1908
        %v1929 = vsel %vm1927, %v1924, %v1910
        %v1930 = vsel %vm1927, %v1925, %v1912
        %v1931 = vsel %vm1927, %v1926, %v1914
        %1932 = vst [vmem:[%s360] sm:$0xff] %v1928
        %1933 = vst [vmem:[%s360 + $0x8] sm:$0xff] %v1929
        %1934 = vst [vmem:[%s360 + $0x10] sm:$0xff] %v1930
        %1935 = vst [vmem:[%s360 + $0x18] sm:$0xff] %v1931
        %s1936 = sand.u32 %s223, 1
        %s1937 = scalar_lea.sflag [#allocation3], %s1936
        %s1938 = sand.u32 %s223, 1
        %s1939 = smul.addr %s1938, 32
        %s1940 = scalar_lea.vmem [#allocation2], %s1939
        // Predicated region
        $region53: #{tpu_custom_call.1} parent=51 // pred_check
          %p1941 = pneg %p233
        $region54: #{tpu_custom_call.1} parent=51 // pred_check_branch
          %1943 = sbr.rel (%p1941) target = $region56
        $region55: #{tpu_custom_call.1} parent=51 // pred_region
          %s1944 = smul.u32 4, %s22
          %s1946 = ssub.s32 512, 512
          %1947 = vsyncadd %s1937, %s1946
          %s1948 = smul.addr %s1944, 128
          %s1949 = scalar_lea.hbm %s8, %s1948
          %s1950 = sshll.u32 %s1940, 4
          %s1951 = int_to_ptr.vmem [resolvable:$true] %s1950
          %1956 = dma.vmem_to_hbm [thread:$0]  %s1951, 512, %s1949, %s1937, 128, 128, 8
        $region56: #{tpu_custom_call.1} parent=51 // pred_fallthru
          _
      $region52: #{tpu_custom_call.1} parent=5 // pred_fallthru
        _
      %p1957 = scmp.le.s32.totalorder 2, %s17
      // Predicated region
      $region57: #{tpu_custom_call.1} parent=5 // pred_check
        %p1958 = pneg %p1957
      $region58: #{tpu_custom_call.1} parent=5 // pred_check_branch
        %1960 = sbr.rel (%p1958) target = $region60
      $region59: #{tpu_custom_call.1} parent=5 // pred_region
        %s1961 = ssub.s32 %s17, 2
        // Predicated region
        $region61: #{tpu_custom_call.1} parent=59 // pred_check
          %p1962 = pneg %p239
        $region62: #{tpu_custom_call.1} parent=59 // pred_check_branch
          %1964 = sbr.rel (%p1962) target = $region64
        $region63: #{tpu_custom_call.1} parent=59 // pred_region
          %s1965 = sand.u32 %s224, 1
          %s1966 = scalar_lea.sflag [#allocation3], %s1965
          %s1967 = sand.u32 %s224, 1
          %s1968 = smul.addr %s1967, 32
          %s1969 = scalar_lea.vmem [#allocation2], %s1968
          %1970 = dma.done %s1966, 512
        $region64: #{tpu_custom_call.1} parent=59 // pred_fallthru
          _
      $region60: #{tpu_custom_call.1} parent=5 // pred_fallthru
        _
    $region6: #{tpu_custom_call.1} parent=1 // loop_footer
      %s21 = sadd.s32 1, %s17
    $region7: #{tpu_custom_call.1} parent=1 // loop_footer_branch
      %16 = sbr.rel target = $region3
    $region8: #{tpu_custom_call.1} parent=1 // loop_exit
      _
    %1971 = vsyncpa [#allocation3], 1
    %s1972 = scalar_lea.sflag [#allocation3], 1
    %1973 = vsyncpa %s1972, 1

</llo_original>
